<compile_context>
chip_gen: v5e
topology: v5e:2x2
jax: 0.10.0
libtpu: 0.0.40
codegen_flags: <defaults>
</compile_context>

<pallas_src>
import jax
import jax.numpy as jnp
from jax import lax
from jax.experimental import pallas as pl
from jax.experimental.pallas import tpu as pltpu


def _mlp_kernel(x_ref, w1_ref, b1_ref, w2_ref, b2_ref, w3_ref, b3_ref, o_ref):
    # x_ref: (TB, 5) f32       w1: (200, 5)  bf16   b1: (200, 1) bf16
    # w2: (200, 200) bf16      b2: (200, 1)  bf16
    # w3: (200, 1)   f32       b3: (1, 1)    f32    o_ref: (1, TB) f32
    x = x_ref[...].astype(jnp.bfloat16)                         # (TB, 5)

    # fc1 + ReLU.  Contract the feature axis of both operands so the result
    # is already transposed (200, TB) -- batch on the lane axis -- without a
    # wrapper-side transpose of x (MXU, bf16 in / f32 accumulate).
    h1 = lax.dot_general(w1_ref[...], x,
                         dimension_numbers=(((1,), (1,)), ((), ())),
                         preferred_element_type=jnp.float32)    # (200, TB) f32
    # bias + ReLU in bf16 (the bf16 cast is needed for fc2 anyway).
    h1 = jnp.maximum(h1.astype(jnp.bfloat16) + b1_ref[...], 0.0)

    # fc2 + ReLU (dominant FLOPs; MXU, bf16 in / f32 accumulate).
    h2 = jnp.dot(w2_ref[...], h1, preferred_element_type=jnp.float32)
    h2 = jnp.maximum(h2.astype(jnp.bfloat16) + b2_ref[...], 0.0)  # (200, TB) bf16

    # fc3 (N=1): VPU multiply + sublane (XLU) reduce in f32 -- keeps the MXU
    # free and the lane axis dense.
    z = jnp.sum(h2.astype(jnp.float32) * w3_ref[...], axis=0, keepdims=True)
    z = z + b3_ref[...]                                          # (1, TB) f32

    # sigmoid via EUP exp + approximate reciprocal.
    o_ref[...] = pl.reciprocal(1.0 + jnp.exp(-z), approx=True)


def _default_block_b(B):
    # Big tiles amortize the ~0.35us per-grid-step overhead; keep grid >= 2
    # whenever possible so the "parallel" axis shards across both v7x
    # TensorCores.  Cap at 4096 rows (~15 MiB peak VMEM incl. temporaries).
    bb = ((pl.cdiv(B, 2) + 127) // 128) * 128
    return int(max(128, min(4096, bb)))


def ball_ball_detect_net_forward(x, params, *, block_b=None):
    """x: (B, 5) float32.  params: PyTorch-layout weights (see init_params)."""
    B, F = x.shape
    assert F == 5

    if block_b is None:
        block_b = _default_block_b(B)
    grid_b = pl.cdiv(B, block_b)

    # PyTorch layout [out, in] / [out] -> kernel layouts (tiny one-time casts).
    w1 = params["w1"].astype(jnp.bfloat16)                       # (200, 5)
    w2 = params["w2"].astype(jnp.bfloat16)                       # (200, 200)
    b1 = params["b1"].reshape(200, 1).astype(jnp.bfloat16)       # (200, 1)
    b2 = params["b2"].reshape(200, 1).astype(jnp.bfloat16)       # (200, 1)
    w3 = params["w3"].reshape(200, 1).astype(jnp.float32)        # (1,200)->(200,1)
    b3 = params["b3"].reshape(1, 1).astype(jnp.float32)          # (1, 1)

    # Weights/biases: constant index_map -> fetched once, VMEM-resident.
    const = lambda arr: pl.BlockSpec(arr.shape, lambda i: (0, 0))

    flops = 2 * B * (5 * 200 + 200 * 200 + 200)
    bytes_accessed = (x.size * 4 + B * 4
                      + (w1.size + w2.size + b1.size + b2.size) * 2
                      + (w3.size + b3.size) * 4)

    out = pl.pallas_call(
        _mlp_kernel,
        out_shape=jax.ShapeDtypeStruct((1, B), jnp.float32),
        grid=(grid_b,),
        in_specs=[
            pl.BlockSpec((block_b, 5), lambda i: (i, 0)),        # x batch tile
            const(w1), const(b1), const(w2), const(b2), const(w3), const(b3),
        ],
        out_specs=pl.BlockSpec((1, block_b), lambda i: (0, i)),  # lane-dense out
        compiler_params=pltpu.CompilerParams(
            dimension_semantics=("parallel",),
            vmem_limit_bytes=48 << 20,
        ),
        cost_estimate=pl.CostEstimate(
            flops=flops, transcendentals=B, bytes_accessed=bytes_accessed),
    )(x, w1, b1, w2, b2, w3, b3)

    return out.reshape(B, 1)


def init_params(key):
    """PyTorch nn.Linear default init: uniform(-1/sqrt(fan_in), 1/sqrt(fan_in)),
    weights stored [out, in], biases [out]."""
    def linear(k, fan_in, fan_out):
        kw, kb = jax.random.split(k)
        bound = 1.0 / jnp.sqrt(jnp.float32(fan_in))
        w = jax.random.uniform(kw, (fan_out, fan_in), jnp.float32, -bound, bound)
        b = jax.random.uniform(kb, (fan_out,), jnp.float32, -bound, bound)
        return w, b

    k1, k2, k3 = jax.random.split(key, 3)
    w1, b1 = linear(k1, 5, 200)
    w2, b2 = linear(k2, 200, 200)
    w3, b3 = linear(k3, 200, 1)
    return {"w1": w1, "b1": b1, "w2": w2, "b2": b2, "w3": w3, "b3": b3}


def _reference(x, p):
    h1 = jax.nn.relu(x @ p["w1"].T + p["b1"])
    h2 = jax.nn.relu(h1 @ p["w2"].T + p["b2"])
    return jax.nn.sigmoid(h2 @ p["w3"].T + p["b3"])


if __name__ == "__main__":
    key = jax.random.PRNGKey(0)
    kx, kp = jax.random.split(key)

    # B not a multiple of the tile -> default picker gives block_b=256,
    # grid=2, with a partial edge block (exercises OOB-block handling and the
    # multi-step / megacore-friendly grid).
    B = 300
    x = jax.random.normal(kx, (B, 5), dtype=jnp.float32)
    params = init_params(kp)

    out = ball_ball_detect_net_forward(x, params)
    out = jax.block_until_ready(out)

    ref = _reference(x, params)
    assert out.shape == (B, 1), out.shape
    # bf16 MXU matmuls + bf16 bias/ReLU vs f32 reference -> loose tolerance
    # (sigmoid output in [0,1]; observed error << 1e-2).
    assert jnp.allclose(out, ref, atol=2e-2, rtol=2e-2), "mismatch vs JAX reference"

    print("KERNEL_OK")
</pallas_src>

<mosaic_0001>
module attributes {stable_mosaic.version = 11 : i64} {
  func.func @_mlp_kernel(%arg0: i32, %arg1: memref<256x5xf32, #tpu.memory_space<vmem>>, %arg2: memref<200x5xbf16, #tpu.memory_space<vmem>>, %arg3: memref<200x1xbf16, #tpu.memory_space<vmem>>, %arg4: memref<200x200xbf16, #tpu.memory_space<vmem>>, %arg5: memref<200x1xbf16, #tpu.memory_space<vmem>>, %arg6: memref<200x1xf32, #tpu.memory_space<vmem>>, %arg7: memref<1x1xf32, #tpu.memory_space<vmem>>, %arg8: memref<1x256xf32, #tpu.memory_space<vmem>>) attributes {dimension_semantics = [#tpu.dimension_semantics<parallel>], iteration_bounds = array<i64: 2>, scalar_prefetch = 0 : i64, scratch_operands = 0 : i64, tpu.core_type = #tpu.core_type<tc>, window_params = [{transform_indices = @transform_0, window_bounds = array<i64: 256, 5>}, {pipeline_mode = #tpu.pipeline_mode<synchronous>, transform_indices = @transform_1, window_bounds = array<i64: 200, 5>}, {pipeline_mode = #tpu.pipeline_mode<synchronous>, transform_indices = @transform_2, window_bounds = array<i64: 200, 1>}, {pipeline_mode = #tpu.pipeline_mode<synchronous>, transform_indices = @transform_3, window_bounds = array<i64: 200, 200>}, {pipeline_mode = #tpu.pipeline_mode<synchronous>, transform_indices = @transform_4, window_bounds = array<i64: 200, 1>}, {pipeline_mode = #tpu.pipeline_mode<synchronous>, transform_indices = @transform_5, window_bounds = array<i64: 200, 1>}, {pipeline_mode = #tpu.pipeline_mode<synchronous>, transform_indices = @transform_6, window_bounds = array<i64: 1, 1>}, {transform_indices = @transform_7, window_bounds = array<i64: 1, 256>}]} {
    %c0 = arith.constant 0 : index
    %c0_0 = arith.constant 0 : index
    %0 = vector.load %arg1[%c0, %c0_0] : memref<256x5xf32, #tpu.memory_space<vmem>>, vector<256x5xf32>
    %1 = arith.truncf %0 : vector<256x5xf32> to vector<256x5xbf16>
    %c0_1 = arith.constant 0 : index
    %c0_2 = arith.constant 0 : index
    %2 = vector.load %arg2[%c0_1, %c0_2] : memref<200x5xbf16, #tpu.memory_space<vmem>>, vector<200x5xbf16>
    %cst = arith.constant dense<0.000000e+00> : vector<200x256xf32>
    %3 = tpu.matmul %2, %1, %cst {dimension_numbers = #tpu.dot_dimension_numbers<[1], [1], [0], [0], [0, 0, 1, 0], [], []>} : vector<200x5xbf16>, vector<256x5xbf16>, vector<200x256xf32> -> vector<200x256xf32>
    %4 = arith.truncf %3 : vector<200x256xf32> to vector<200x256xbf16>
    %c0_3 = arith.constant 0 : index
    %c0_4 = arith.constant 0 : index
    %5 = vector.load %arg3[%c0_3, %c0_4] : memref<200x1xbf16, #tpu.memory_space<vmem>>, vector<200x1xbf16>
    %6 = vector.broadcast %5 : vector<200x1xbf16> to vector<200x256xbf16>
    %7 = arith.addf %4, %6 : vector<200x256xbf16>
    %cst_5 = arith.constant 0.000000e+00 : bf16
    %8 = vector.broadcast %cst_5 : bf16 to vector<200x256xbf16>
    %9 = arith.maximumf %7, %8 : vector<200x256xbf16>
    %c0_6 = arith.constant 0 : index
    %c0_7 = arith.constant 0 : index
    %10 = vector.load %arg4[%c0_6, %c0_7] : memref<200x200xbf16, #tpu.memory_space<vmem>>, vector<200x200xbf16>
    %cst_8 = arith.constant dense<0.000000e+00> : vector<200x256xf32>
    %11 = tpu.matmul %10, %9, %cst_8 {dimension_numbers = #tpu.dot_dimension_numbers<[1], [0], [0], [1], [0, 0, 1, 1], [], []>} : vector<200x200xbf16>, vector<200x256xbf16>, vector<200x256xf32> -> vector<200x256xf32>
    %12 = arith.truncf %11 : vector<200x256xf32> to vector<200x256xbf16>
    %c0_9 = arith.constant 0 : index
    %c0_10 = arith.constant 0 : index
    %13 = vector.load %arg5[%c0_9, %c0_10] : memref<200x1xbf16, #tpu.memory_space<vmem>>, vector<200x1xbf16>
    %14 = vector.broadcast %13 : vector<200x1xbf16> to vector<200x256xbf16>
    %15 = arith.addf %12, %14 : vector<200x256xbf16>
    %cst_11 = arith.constant 0.000000e+00 : bf16
    %16 = vector.broadcast %cst_11 : bf16 to vector<200x256xbf16>
    %17 = arith.maximumf %15, %16 : vector<200x256xbf16>
    %18 = arith.extf %17 : vector<200x256xbf16> to vector<200x256xf32>
    %c0_12 = arith.constant 0 : index
    %c0_13 = arith.constant 0 : index
    %19 = vector.load %arg6[%c0_12, %c0_13] : memref<200x1xf32, #tpu.memory_space<vmem>>, vector<200x1xf32>
    %20 = vector.broadcast %19 : vector<200x1xf32> to vector<200x256xf32>
    %21 = arith.mulf %18, %20 : vector<200x256xf32>
    %cst_14 = arith.constant dense<0.000000e+00> : vector<256xf32>
    %22 = vector.multi_reduction <add>, %21, %cst_14 [0] : vector<200x256xf32> to vector<256xf32>
    %23 = vector.shape_cast %22 : vector<256xf32> to vector<1x256xf32>
    %c0_15 = arith.constant 0 : index
    %c0_16 = arith.constant 0 : index
    %24 = vector.load %arg7[%c0_15, %c0_16] : memref<1x1xf32, #tpu.memory_space<vmem>>, vector<1x1xf32>
    %25 = vector.broadcast %24 : vector<1x1xf32> to vector<1x256xf32>
    %26 = arith.addf %23, %25 : vector<1x256xf32>
    %cst_17 = arith.constant 0.000000e+00 : f32
    %27 = vector.broadcast %cst_17 : f32 to vector<1x256xf32>
    %28 = arith.subf %27, %26 : vector<1x256xf32>
    %29 = math.exp %28 : vector<1x256xf32>
    %cst_18 = arith.constant 1.000000e+00 : f32
    %30 = vector.broadcast %cst_18 : f32 to vector<1x256xf32>
    %31 = arith.addf %30, %29 : vector<1x256xf32>
    %32 = tpu.reciprocal %31 {approx = true} : vector<1x256xf32> -> vector<1x256xf32>
    %c0_19 = arith.constant 0 : index
    %c0_20 = arith.constant 0 : index
    %33 = vector.load %arg8[%c0_19, %c0_20] : memref<1x256xf32, #tpu.memory_space<vmem>>, vector<1x256xf32>
    tpu.vector_store %arg8[%c0_19, %c0_20], %32 {strides = array<i32>} : memref<1x256xf32, #tpu.memory_space<vmem>>, vector<1x256xf32>,
    return
  }
  func.func @transform_0(%arg0: i32) -> (i32, i32) {
    %c0_i32 = arith.constant 0 : i32
    %c0_i32_0 = arith.constant 0 : i32
    return %arg0, %c0_i32 : i32, i32
  }
  func.func @transform_1(%arg0: i32) -> (i32, i32) {
    %c0_i32 = arith.constant 0 : i32
    %c0_i32_0 = arith.constant 0 : i32
    %c0_i32_1 = arith.constant 0 : i32
    return %c0_i32, %c0_i32_0 : i32, i32
  }
  func.func @transform_2(%arg0: i32) -> (i32, i32) {
    %c0_i32 = arith.constant 0 : i32
    %c0_i32_0 = arith.constant 0 : i32
    %c0_i32_1 = arith.constant 0 : i32
    return %c0_i32, %c0_i32_0 : i32, i32
  }
  func.func @transform_3(%arg0: i32) -> (i32, i32) {
    %c0_i32 = arith.constant 0 : i32
    %c0_i32_0 = arith.constant 0 : i32
    %c0_i32_1 = arith.constant 0 : i32
    return %c0_i32, %c0_i32_0 : i32, i32
  }
  func.func @transform_4(%arg0: i32) -> (i32, i32) {
    %c0_i32 = arith.constant 0 : i32
    %c0_i32_0 = arith.constant 0 : i32
    %c0_i32_1 = arith.constant 0 : i32
    return %c0_i32, %c0_i32_0 : i32, i32
  }
  func.func @transform_5(%arg0: i32) -> (i32, i32) {
    %c0_i32 = arith.constant 0 : i32
    %c0_i32_0 = arith.constant 0 : i32
    %c0_i32_1 = arith.constant 0 : i32
    return %c0_i32, %c0_i32_0 : i32, i32
  }
  func.func @transform_6(%arg0: i32) -> (i32, i32) {
    %c0_i32 = arith.constant 0 : i32
    %c0_i32_0 = arith.constant 0 : i32
    %c0_i32_1 = arith.constant 0 : i32
    return %c0_i32, %c0_i32_0 : i32, i32
  }
  func.func @transform_7(%arg0: i32) -> (i32, i32) {
    %c0_i32 = arith.constant 0 : i32
    %c0_i32_0 = arith.constant 0 : i32
    return %c0_i32, %arg0 : i32, i32
  }
}

</mosaic_0001>

<llo_original>
// kernel: tpu_custom_call.1
$region0: #{tpu_custom_call.1}
  #allocation0 [shape = 'u32[]', space=smem, size = 0x4, offset = 0x4, fixed_abs, tag = 'smem constant byte address 0x4 - core index']
  #allocation1 [shape = 'u32[72,128]{1,0:T(1,128)}', space=vmem, size = 0x9000, scoped, tag = 'internal scratch']
  #allocation2 [shape = 'f32[1,1]{1,0:T(1,128)S(1)}', space=vmem, size = 0x200, scoped, tag = 'scoped memory for tpu_custom_call.1']
  %s0 = inlined_call_operand.vmem [shape: f32[300,5], index: 0, kind: input, shape index: {}]
  %s1 = inlined_call_operand.vmem [shape: bf16[200,5], index: 1, kind: input, shape index: {}]
  %s2 = inlined_call_operand.vmem [shape: bf16[200,1], index: 2, kind: input, shape index: {}]
  %s3 = inlined_call_operand.vmem [shape: bf16[200,200], index: 3, kind: input, shape index: {}]
  %s4 = inlined_call_operand.vmem [shape: bf16[200,1], index: 4, kind: input, shape index: {}]
  %s5 = inlined_call_operand.vmem [shape: f32[200,1], index: 5, kind: input, shape index: {}]
  %s6 = inlined_call_operand.<no memory space> [shape: f32[1,1], index: 6, kind: input, shape index: {}]
  %s7 = inlined_call_operand.hbm [shape: f32[1,300], index: 7, kind: output, shape index: {}]
  %s8 = sld [smem:[#allocation0]]
  $region61: #{tpu_custom_call.1} parent=0
    _
  %s10 = ssub.s32 1, %s8
  %s11 = scalar_select 0, %s10, %s8
  %v12 = vstv %s6
  %13 = vst [vmem:[#allocation2] sm:$0x1] %v12
  $region1: #{tpu_custom_call.1} parent=0
    #allocation3 [shape = 'u8[2048]{0}', space=vmem, size = 0x800, scoped, tag = 'output window, operand 0']
    #allocation4 [shape = 's32[2]{0}', space=sflag, size = 0x8, scoped, tag = 'scoped memory for tpu_custom_call.1']
    %14 = vsyncpa [#allocation4], 0
    %s15 = scalar_lea.sflag [#allocation4], 1
    %16 = vsyncpa %s15, 0
    loop: start=0, step=1, limit=4
    $region2: #{tpu_custom_call.1} parent=1 // loop_pre_header
      _
    $region3: #{tpu_custom_call.1} parent=1 // loop_header
      %s18 = sphi 0, %s22
      %p19 = scmp.ge.s32.totalorder %s18, 4
      %s28 = sphi 0, %s30
      %s31 = sphi 0, %s28
      %s32 = sphi 0, %s31
      %s48 = sphi 0, %s32
      %s52 = sphi 0, %s52
      %s54 = sphi 0, %s52
      %s55 = sphi 0, %s54
      %s69 = sphi 0, %s55
      %s73 = sphi 0, %s73
      %s75 = sphi 0, %s73
      %s76 = sphi 0, %s75
      %s90 = sphi 0, %s76
      %s94 = sphi 0, %s94
      %s96 = sphi 0, %s94
      %s97 = sphi 0, %s96
      %s111 = sphi 0, %s97
      %s115 = sphi 0, %s115
      %s117 = sphi 0, %s115
      %s118 = sphi 0, %s117
      %s132 = sphi 0, %s118
      %s136 = sphi 0, %s136
      %s138 = sphi 0, %s136
      %s139 = sphi 0, %s138
      %s153 = sphi 0, %s139
      %s157 = sphi 0, %s157
      %s159 = sphi 0, %s157
      %s160 = sphi 0, %s159
      %s174 = sphi 0, %s160
      %s180 = sphi 0, %s182
      %s183 = sphi 0, %s180
      %s184 = sphi 0, %s183
      %s200 = sphi 0, %s184
    $region4: #{tpu_custom_call.1} parent=1 // loop_header_branch
      %21 = sbr.rel (%p19) target = $region8
    $region5: #{tpu_custom_call.1} parent=1 // loop_body
      %s23 = ssub.s32 %s18, 1
      %s24 = ssub.s32 %s18, 2
      %s25 = sadd.s32 %s18, 1
      %s26 = ssub.s32 %s18, %s25
      %p27 = scmp.eq.s32.totalorder %s26, 0
      %s29 = sadd.s32 %s28, 1
      %s30 = scalar_select %p27, %s28, %s29
      %p33 = pneg %p27
      %p34 = scmp.eq.s32.totalorder %s18, 1
      %p35 = por %p33, %p34
      %p36 = scmp.ne.s32.totalorder %s28, %s31
      %p37 = scmp.eq.s32.totalorder %s18, 0
      %p38 = por %p36, %p37
      %p39 = scmp.ne.s32.totalorder %s28, %s31
      %p40 = scmp.eq.s32.totalorder %s23, 1
      %p41 = por %p39, %p40
      %p42 = scmp.ne.s32.totalorder %s31, %s32
      %p43 = scmp.eq.s32.totalorder %s23, 0
      %p44 = por %p42, %p43
      %p45 = scmp.ne.s32.totalorder %s31, %s32
      %p46 = scmp.eq.s32.totalorder %s24, 1
      %p47 = por %p45, %p46
      %p49 = scmp.ne.s32.totalorder %s32, %s48
      %p50 = scmp.eq.s32.totalorder %s24, 0
      %p51 = por %p49, %p50
      %s53 = sadd.s32 %s52, 1
      %p56 = scmp.eq.s32.totalorder %s18, 1
      %p57 = scmp.ne.s32.totalorder %s52, %s54
      %p58 = scmp.eq.s32.totalorder %s18, 0
      %p59 = por %p57, %p58
      %p60 = scmp.ne.s32.totalorder %s52, %s54
      %p61 = scmp.eq.s32.totalorder %s23, 1
      %p62 = por %p60, %p61
      %p63 = scmp.ne.s32.totalorder %s54, %s55
      %p64 = scmp.eq.s32.totalorder %s23, 0
      %p65 = por %p63, %p64
      %p66 = scmp.ne.s32.totalorder %s54, %s55
      %p67 = scmp.eq.s32.totalorder %s24, 1
      %p68 = por %p66, %p67
      %p70 = scmp.ne.s32.totalorder %s55, %s69
      %p71 = scmp.eq.s32.totalorder %s24, 0
      %p72 = por %p70, %p71
      %s74 = sadd.s32 %s73, 1
      %p77 = scmp.eq.s32.totalorder %s18, 1
      %p78 = scmp.ne.s32.totalorder %s73, %s75
      %p79 = scmp.eq.s32.totalorder %s18, 0
      %p80 = por %p78, %p79
      %p81 = scmp.ne.s32.totalorder %s73, %s75
      %p82 = scmp.eq.s32.totalorder %s23, 1
      %p83 = por %p81, %p82
      %p84 = scmp.ne.s32.totalorder %s75, %s76
      %p85 = scmp.eq.s32.totalorder %s23, 0
      %p86 = por %p84, %p85
      %p87 = scmp.ne.s32.totalorder %s75, %s76
      %p88 = scmp.eq.s32.totalorder %s24, 1
      %p89 = por %p87, %p88
      %p91 = scmp.ne.s32.totalorder %s76, %s90
      %p92 = scmp.eq.s32.totalorder %s24, 0
      %p93 = por %p91, %p92
      %s95 = sadd.s32 %s94, 1
      %p98 = scmp.eq.s32.totalorder %s18, 1
      %p99 = scmp.ne.s32.totalorder %s94, %s96
      %p100 = scmp.eq.s32.totalorder %s18, 0
      %p101 = por %p99, %p100
      %p102 = scmp.ne.s32.totalorder %s94, %s96
      %p103 = scmp.eq.s32.totalorder %s23, 1
      %p104 = por %p102, %p103
      %p105 = scmp.ne.s32.totalorder %s96, %s97
      %p106 = scmp.eq.s32.totalorder %s23, 0
      %p107 = por %p105, %p106
      %p108 = scmp.ne.s32.totalorder %s96, %s97
      %p109 = scmp.eq.s32.totalorder %s24, 1
      %p110 = por %p108, %p109
      %p112 = scmp.ne.s32.totalorder %s97, %s111
      %p113 = scmp.eq.s32.totalorder %s24, 0
      %p114 = por %p112, %p113
      %s116 = sadd.s32 %s115, 1
      %p119 = scmp.eq.s32.totalorder %s18, 1
      %p120 = scmp.ne.s32.totalorder %s115, %s117
      %p121 = scmp.eq.s32.totalorder %s18, 0
      %p122 = por %p120, %p121
      %p123 = scmp.ne.s32.totalorder %s115, %s117
      %p124 = scmp.eq.s32.totalorder %s23, 1
      %p125 = por %p123, %p124
      %p126 = scmp.ne.s32.totalorder %s117, %s118
      %p127 = scmp.eq.s32.totalorder %s23, 0
      %p128 = por %p126, %p127
      %p129 = scmp.ne.s32.totalorder %s117, %s118
      %p130 = scmp.eq.s32.totalorder %s24, 1
      %p131 = por %p129, %p130
      %p133 = scmp.ne.s32.totalorder %s118, %s132
      %p134 = scmp.eq.s32.totalorder %s24, 0
      %p135 = por %p133, %p134
      %s137 = sadd.s32 %s136, 1
      %p140 = scmp.eq.s32.totalorder %s18, 1
      %p141 = scmp.ne.s32.totalorder %s136, %s138
      %p142 = scmp.eq.s32.totalorder %s18, 0
      %p143 = por %p141, %p142
      %p144 = scmp.ne.s32.totalorder %s136, %s138
      %p145 = scmp.eq.s32.totalorder %s23, 1
      %p146 = por %p144, %p145
      %p147 = scmp.ne.s32.totalorder %s138, %s139
      %p148 = scmp.eq.s32.totalorder %s23, 0
      %p149 = por %p147, %p148
      %p150 = scmp.ne.s32.totalorder %s138, %s139
      %p151 = scmp.eq.s32.totalorder %s24, 1
      %p152 = por %p150, %p151
      %p154 = scmp.ne.s32.totalorder %s139, %s153
      %p155 = scmp.eq.s32.totalorder %s24, 0
      %p156 = por %p154, %p155
      %s158 = sadd.s32 %s157, 1
      %p161 = scmp.eq.s32.totalorder %s18, 1
      %p162 = scmp.ne.s32.totalorder %s157, %s159
      %p163 = scmp.eq.s32.totalorder %s18, 0
      %p164 = por %p162, %p163
      %p165 = scmp.ne.s32.totalorder %s157, %s159
      %p166 = scmp.eq.s32.totalorder %s23, 1
      %p167 = por %p165, %p166
      %p168 = scmp.ne.s32.totalorder %s159, %s160
      %p169 = scmp.eq.s32.totalorder %s23, 0
      %p170 = por %p168, %p169
      %p171 = scmp.ne.s32.totalorder %s159, %s160
      %p172 = scmp.eq.s32.totalorder %s24, 1
      %p173 = por %p171, %p172
      %p175 = scmp.ne.s32.totalorder %s160, %s174
      %p176 = scmp.eq.s32.totalorder %s24, 0
      %p177 = por %p175, %p176
      %s178 = ssub.s32 %s18, %s25
      %p179 = scmp.eq.s32.totalorder %s178, 0
      %s181 = sadd.s32 %s180, 1
      %s182 = scalar_select %p179, %s180, %s181
      %p185 = pneg %p179
      %p186 = scmp.eq.s32.totalorder %s18, 1
      %p187 = por %p185, %p186
      %p188 = scmp.ne.s32.totalorder %s180, %s183
      %p189 = scmp.eq.s32.totalorder %s18, 0
      %p190 = por %p188, %p189
      %p191 = scmp.ne.s32.totalorder %s180, %s183
      %p192 = scmp.eq.s32.totalorder %s23, 1
      %p193 = por %p191, %p192
      %p194 = scmp.ne.s32.totalorder %s183, %s184
      %p195 = scmp.eq.s32.totalorder %s23, 0
      %p196 = por %p194, %p195
      %p197 = scmp.ne.s32.totalorder %s183, %s184
      %p198 = scmp.eq.s32.totalorder %s24, 1
      %p199 = por %p197, %p198
      %p201 = scmp.ne.s32.totalorder %s184, %s200
      %p202 = scmp.eq.s32.totalorder %s24, 0
      %p203 = por %p201, %p202
      %p204 = scmp.le.s32.totalorder 1, %s18
      %p205 = scmp.lt.s32.totalorder %s18, 3
      %p206 = pnand %p204, %p205
      %p207 = pneg %p206
      // Predicated region
      $region9: #{tpu_custom_call.1} parent=5 // pred_check
        _
      $region10: #{tpu_custom_call.1} parent=5 // pred_check_branch
        %209 = sbr.rel (%p206) target = $region12
      $region11: #{tpu_custom_call.1} parent=5 // pred_region
        %s210 = ssub.s32 %s18, 1
        // Predicated region
        $region13: #{tpu_custom_call.1} parent=11 // pred_check
          %p211 = pneg %p65
        $region14: #{tpu_custom_call.1} parent=11 // pred_check_branch
          %213 = sbr.rel (%p211) target = $region16
        $region15: #{tpu_custom_call.1} parent=11 // pred_region
          _
        $region16: #{tpu_custom_call.1} parent=11 // pred_fallthru
          _
        // Predicated region
        $region17: #{tpu_custom_call.1} parent=11 // pred_check
          %p214 = pneg %p86
        $region18: #{tpu_custom_call.1} parent=11 // pred_check_branch
          %216 = sbr.rel (%p214) target = $region20
        $region19: #{tpu_custom_call.1} parent=11 // pred_region
          _
        $region20: #{tpu_custom_call.1} parent=11 // pred_fallthru
          _
        // Predicated region
        $region21: #{tpu_custom_call.1} parent=11 // pred_check
          %p217 = pneg %p107
        $region22: #{tpu_custom_call.1} parent=11 // pred_check_branch
          %219 = sbr.rel (%p217) target = $region24
        $region23: #{tpu_custom_call.1} parent=11 // pred_region
          _
        $region24: #{tpu_custom_call.1} parent=11 // pred_fallthru
          _
        // Predicated region
        $region25: #{tpu_custom_call.1} parent=11 // pred_check
          %p220 = pneg %p128
        $region26: #{tpu_custom_call.1} parent=11 // pred_check_branch
          %222 = sbr.rel (%p220) target = $region28
        $region27: #{tpu_custom_call.1} parent=11 // pred_region
          _
        $region28: #{tpu_custom_call.1} parent=11 // pred_fallthru
          _
        // Predicated region
        $region29: #{tpu_custom_call.1} parent=11 // pred_check
          %p223 = pneg %p149
        $region30: #{tpu_custom_call.1} parent=11 // pred_check_branch
          %225 = sbr.rel (%p223) target = $region32
        $region31: #{tpu_custom_call.1} parent=11 // pred_region
          _
        $region32: #{tpu_custom_call.1} parent=11 // pred_fallthru
          _
        // Predicated region
        $region33: #{tpu_custom_call.1} parent=11 // pred_check
          %p226 = pneg %p170
        $region34: #{tpu_custom_call.1} parent=11 // pred_check_branch
          %228 = sbr.rel (%p226) target = $region36
        $region35: #{tpu_custom_call.1} parent=11 // pred_region
          _
        $region36: #{tpu_custom_call.1} parent=11 // pred_fallthru
          _
      $region12: #{tpu_custom_call.1} parent=5 // pred_fallthru
        _
      %p229 = scmp.lt.s32.totalorder %s18, 2
      // Predicated region
      $region37: #{tpu_custom_call.1} parent=5 // pred_check
        %p230 = pneg %p229
      $region38: #{tpu_custom_call.1} parent=5 // pred_check_branch
        %232 = sbr.rel (%p230) target = $region40
      $region39: #{tpu_custom_call.1} parent=5 // pred_region
        // Predicated region
        $region41: #{tpu_custom_call.1} parent=39 // pred_check
          %p233 = pneg %p38
        $region42: #{tpu_custom_call.1} parent=39 // pred_check_branch
          %235 = sbr.rel (%p233) target = $region44
        $region43: #{tpu_custom_call.1} parent=39 // pred_region
          %s236 = smul.u32 32, %s18
          %s237 = ssub.s32 38, %s236
          %p238 = scmp.lt.s32.totalorder %s237, 32
          %s239 = scalar_select %p238, %s237, 32
          %s240 = smul.u32 8, %s239
          %p241 = scmp.lt.s32.totalorder %s236, 37
          %s242 = scalar_select %p241, %s236, 37
          %s243 = smul.addr %s242, 8
          %s244 = scalar_lea.vmem %s0, %s243
          %s245 = smul.u32 32, %s18
          %s246 = ssub.s32 38, %s245
          %p247 = scmp.lt.s32.totalorder %s246, 32
          %s248 = scalar_select %p247, %s246, 32
          %s249 = smul.u32 8, %s248
        $region44: #{tpu_custom_call.1} parent=39 // pred_fallthru
          _
      $region40: #{tpu_custom_call.1} parent=5 // pred_fallthru
        _
      %p250 = scmp.le.s32.totalorder 1, %s18
      %p251 = scmp.lt.s32.totalorder %s18, 3
      %p252 = pnand %p250, %p251
      %p253 = pneg %p252
      // Predicated region
      $region45: #{tpu_custom_call.1} parent=5 // pred_check
        _
      $region46: #{tpu_custom_call.1} parent=5 // pred_check_branch
        %255 = sbr.rel (%p252) target = $region48
      $region47: #{tpu_custom_call.1} parent=5 // pred_region
        %s256 = ssub.s32 %s18, 1
        %s257 = smul.u32 32, %s23
        %s258 = ssub.s32 38, %s257
        %p259 = scmp.lt.s32.totalorder %s258, 32
        %s260 = scalar_select %p259, %s258, 32
        %s261 = smul.u32 8, %s260
        %p262 = scmp.lt.s32.totalorder %s257, 37
        %s263 = scalar_select %p262, %s257, 37
        %s264 = smul.addr %s263, 8
        %s265 = scalar_lea.vmem %s0, %s264
        %p266 = pneg %p44
        %p267 = pneg %p41
        %p268 = pneg %p65
        %p269 = pneg %p62
        %p270 = pneg %p86
        %p271 = pneg %p83
        %p272 = pneg %p107
        %p273 = pneg %p104
        %p274 = pneg %p128
        %p275 = pneg %p125
        %p276 = pneg %p149
        %p277 = pneg %p146
        %p278 = pneg %p170
        %p279 = pneg %p167
        %p280 = pneg %p196
        %p281 = pneg %p193
        %s282 = sand.u32 %s183, 1
        %s283 = scalar_lea.sflag [#allocation4], %s282
        %s284 = sand.u32 %s183, 1
        %s285 = smul.addr %s284, 2
        %s286 = scalar_lea.vmem [#allocation3], %s285
        %s287 = smul.u32 32, %s23
        %s288 = ssub.s32 38, %s287
        %p289 = scmp.lt.s32.totalorder %s288, 32
        %s290 = scalar_select %p289, %s288, 32
        %s291 = smul.u32 8, %s290
        %p292 = scmp.lt.s32.totalorder %s287, 37
        %s293 = scalar_select %p292, %s287, 37
        %s294 = smul.addr %s293, 8
        %s295 = scalar_lea.vmem %s0, %s294
        %s296 = smul.u32 32, %s23
        %s297 = ssub.s32 38, %s296
        %p298 = scmp.lt.s32.totalorder %s297, 32
        %s299 = scalar_select %p298, %s297, 32
        %s300 = smul.u32 8, %s299
        %s301 = smul.u32 2, %s23
        %s302 = ssub.s32 3, %s301
        %p303 = scmp.lt.s32.totalorder %s302, 2
        %s304 = scalar_select %p303, %s302, 2
        %v306 = vld [vmem:[%s295] sm:$0xff]
        %v307 = vld [vmem:[%s295 + $0x8] sm:$0xff]
        %v308 = vld [vmem:[%s295 + $0x10] sm:$0xff]
        %v309 = vld [vmem:[%s295 + $0x18] sm:$0xff]
        %v310 = vld [vmem:[%s295 + $0x20] sm:$0xff]
        %v311 = vld [vmem:[%s295 + $0x28] sm:$0xff]
        %v312 = vld [vmem:[%s295 + $0x30] sm:$0xff]
        %v313 = vld [vmem:[%s295 + $0x38] sm:$0xff]
        %v314 = vld [vmem:[%s295 + $0x40] sm:$0xff]
        %v315 = vld [vmem:[%s295 + $0x48] sm:$0xff]
        %v316 = vld [vmem:[%s295 + $0x50] sm:$0xff]
        %v317 = vld [vmem:[%s295 + $0x58] sm:$0xff]
        %v318 = vld [vmem:[%s295 + $0x60] sm:$0xff]
        %v319 = vld [vmem:[%s295 + $0x68] sm:$0xff]
        %v320 = vld [vmem:[%s295 + $0x70] sm:$0xff]
        %v321 = vld [vmem:[%s295 + $0x78] sm:$0xff]
        %v322 = vld [vmem:[%s295 + $0x80] sm:$0xff]
        %v323 = vld [vmem:[%s295 + $0x88] sm:$0xff]
        %v324 = vld [vmem:[%s295 + $0x90] sm:$0xff]
        %v325 = vld [vmem:[%s295 + $0x98] sm:$0xff]
        %v326 = vld [vmem:[%s295 + $0xa0] sm:$0xff]
        %v327 = vld [vmem:[%s295 + $0xa8] sm:$0xff]
        %v328 = vld [vmem:[%s295 + $0xb0] sm:$0xff]
        %v329 = vld [vmem:[%s295 + $0xb8] sm:$0xff]
        %v330 = vld [vmem:[%s295 + $0xc0] sm:$0xff]
        %v331 = vld [vmem:[%s295 + $0xc8] sm:$0xff]
        %v332 = vld [vmem:[%s295 + $0xd0] sm:$0xff]
        %v333 = vld [vmem:[%s295 + $0xd8] sm:$0xff]
        %v334 = vld [vmem:[%s295 + $0xe0] sm:$0xff]
        %v335 = vld [vmem:[%s295 + $0xe8] sm:$0xff]
        %v336 = vld [vmem:[%s295 + $0xf0] sm:$0xff]
        %v337 = vld [vmem:[%s295 + $0xf8] sm:$0xff]
        %v338 = vpack.c.bf16 %v307, %v306
        %v339 = vpack.c.bf16 %v309, %v308
        %v340 = vpack.c.bf16 %v311, %v310
        %v341 = vpack.c.bf16 %v313, %v312
        %v342 = vpack.c.bf16 %v315, %v314
        %v343 = vpack.c.bf16 %v317, %v316
        %v344 = vpack.c.bf16 %v319, %v318
        %v345 = vpack.c.bf16 %v321, %v320
        %v346 = vpack.c.bf16 %v323, %v322
        %v347 = vpack.c.bf16 %v325, %v324
        %v348 = vpack.c.bf16 %v327, %v326
        %v349 = vpack.c.bf16 %v329, %v328
        %v350 = vpack.c.bf16 %v331, %v330
        %v351 = vpack.c.bf16 %v333, %v332
        %v352 = vpack.c.bf16 %v335, %v334
        %v353 = vpack.c.bf16 %v337, %v336
        %v354 = vld [vmem:[%s1] sm:$0xf]
        %v355 = vld [vmem:[%s1 + $0x4] sm:$0xf]
        %v356 = vld [vmem:[%s1 + $0x8] sm:$0xf]
        %v357 = vld [vmem:[%s1 + $0xc] sm:$0xf]
        %v358 = vld [vmem:[%s1 + $0x10] sm:$0xf]
        %v359 = vld [vmem:[%s1 + $0x14] sm:$0xf]
        %v360 = vld [vmem:[%s1 + $0x18] sm:$0xf]
        %v361 = vld [vmem:[%s1 + $0x1c] sm:$0xf]
        %v362 = vld [vmem:[%s1 + $0x20] sm:$0xf]
        %v363 = vld [vmem:[%s1 + $0x24] sm:$0xf]
        %v364 = vld [vmem:[%s1 + $0x28] sm:$0xf]
        %v365 = vld [vmem:[%s1 + $0x2c] sm:$0xf]
        %v366 = vld [vmem:[%s1 + $0x30] sm:$0xf]
        %v367 = vld [vmem:[%s1 + $0x34] sm:$0xf]
        %v368 = vld [vmem:[%s1 + $0x38] sm:$0xf]
        %v369 = vld [vmem:[%s1 + $0x3c] sm:$0xf]
        %v370 = vld [vmem:[%s1 + $0x40] sm:$0xf]
        %v371 = vld [vmem:[%s1 + $0x44] sm:$0xf]
        %v372 = vld [vmem:[%s1 + $0x48] sm:$0xf]
        %v373 = vld [vmem:[%s1 + $0x4c] sm:$0xf]
        %v374 = vld [vmem:[%s1 + $0x50] sm:$0xf]
        %v375 = vld [vmem:[%s1 + $0x54] sm:$0xf]
        %v376 = vld [vmem:[%s1 + $0x58] sm:$0xf]
        %v377 = vld [vmem:[%s1 + $0x5c] sm:$0xf]
        %v378 = vld [vmem:[%s1 + $0x60] sm:$0xf]
        %v404 = vunpack.c.l.b16 %v354
        %v405 = vunpack.c.l.b16 %v355
        %v406 = vunpack.c.l.b16 %v356
        %v407 = vunpack.c.l.b16 %v357
        %v408 = vunpack.c.l.b16 %v358
        %v409 = vunpack.c.l.b16 %v359
        %v410 = vunpack.c.l.b16 %v360
        %v411 = vunpack.c.l.b16 %v361
        %v412 = vunpack.c.l.b16 %v362
        %v413 = vunpack.c.l.b16 %v363
        %v414 = vunpack.c.l.b16 %v364
        %v415 = vunpack.c.l.b16 %v365
        %v416 = vunpack.c.l.b16 %v366
        %v417 = vunpack.c.l.b16 %v367
        %v418 = vunpack.c.l.b16 %v368
        %v419 = vunpack.c.l.b16 %v369
        %v420 = vunpack.c.l.b16 %v370
        %v421 = vunpack.c.l.b16 %v371
        %v422 = vunpack.c.l.b16 %v372
        %v423 = vunpack.c.l.b16 %v373
        %v424 = vunpack.c.l.b16 %v374
        %v425 = vunpack.c.l.b16 %v375
        %v426 = vunpack.c.l.b16 %v376
        %v427 = vunpack.c.l.b16 %v377
        %v428 = vunpack.c.l.b16 %v378
        %v429 = vpack.c.b16 %v405, %v404
        %v430 = vpack.c.b16 %v407, %v406
        %v431 = vpack.c.b16 %v409, %v408
        %v432 = vpack.c.b16 %v411, %v410
        %v433 = vpack.c.b16 %v413, %v412
        %v434 = vpack.c.b16 %v415, %v414
        %v435 = vpack.c.b16 %v417, %v416
        %v436 = vpack.c.b16 %v419, %v418
        %v437 = vpack.c.b16 %v421, %v420
        %v438 = vpack.c.b16 %v423, %v422
        %v439 = vpack.c.b16 %v425, %v424
        %v440 = vpack.c.b16 %v427, %v426
        %v441 = vpack.c.b16 %v428, %v428
        %vm442 = vcmask 39936
        %v444 = vsel %vm442, %v429, 0
        %v447 = vsel %vm442, %v430, 0
        %v450 = vsel %vm442, %v431, 0
        %v453 = vsel %vm442, %v432, 0
        %v456 = vsel %vm442, %v433, 0
        %v459 = vsel %vm442, %v434, 0
        %v462 = vsel %vm442, %v435, 0
        %v465 = vsel %vm442, %v436, 0
        %v468 = vsel %vm442, %v437, 0
        %v471 = vsel %vm442, %v438, 0
        %v474 = vsel %vm442, %v439, 0
        %v477 = vsel %vm442, %v440, 0
        %v480 = vsel %vm442, %v441, 0
        %v483 = vsel %vm442, %v338, 0
        %v486 = vsel %vm442, %v339, 0
        %v489 = vsel %vm442, %v340, 0
        %v492 = vsel %vm442, %v341, 0
        %v495 = vsel %vm442, %v342, 0
        %v498 = vsel %vm442, %v343, 0
        %v501 = vsel %vm442, %v344, 0
        %v504 = vsel %vm442, %v345, 0
        %v507 = vsel %vm442, %v346, 0
        %v510 = vsel %vm442, %v347, 0
        %v513 = vsel %vm442, %v348, 0
        %v516 = vsel %vm442, %v349, 0
        %v519 = vsel %vm442, %v350, 0
        %v522 = vsel %vm442, %v351, 0
        %v525 = vsel %vm442, %v352, 0
        %v528 = vsel %vm442, %v353, 0
        %530 = vmatpush.bf16.xpose.msra.mxu0 %v504
        %531 = vmatpush.bf16.xpose.msra.mxu0 %v501
        %532 = vmatpush.bf16.xpose.msra.mxu0 %v498
        %533 = vmatpush.bf16.xpose.msra.mxu0 %v495
        %534 = vmatpush.bf16.xpose.msra.mxu0 %v492
        %535 = vmatpush.bf16.xpose.msra.mxu0 %v489
        %536 = vmatpush.bf16.xpose.msra.mxu0 %v486
        %537 = vmatpush.bf16.xpose.msra.mxu0 %v483
        %538 = vmatmul.bf16.gmra.mxu0 %v444
        %v539 = vpop.f32.mrf.mxu0
        %v540 = vadd.f32 0.0, %v539
        %v541 = vpop.f32.mrf.mxu0
        %v542 = vadd.f32 0.0, %v541
        %543 = vmatmul.bf16.gmra.mxu0 %v447
        %v544 = vpop.f32.mrf.mxu0
        %v545 = vadd.f32 0.0, %v544
        %v546 = vpop.f32.mrf.mxu0
        %v547 = vadd.f32 0.0, %v546
        %548 = vmatmul.bf16.gmra.mxu0 %v450
        %v549 = vpop.f32.mrf.mxu0
        %v550 = vadd.f32 0.0, %v549
        %v551 = vpop.f32.mrf.mxu0
        %v552 = vadd.f32 0.0, %v551
        %553 = vmatmul.bf16.gmra.mxu0 %v453
        %v554 = vpop.f32.mrf.mxu0
        %v555 = vadd.f32 0.0, %v554
        %v556 = vpop.f32.mrf.mxu0
        %v557 = vadd.f32 0.0, %v556
        %558 = vmatmul.bf16.gmra.mxu0 %v456
        %v559 = vpop.f32.mrf.mxu0
        %v560 = vadd.f32 0.0, %v559
        %v561 = vpop.f32.mrf.mxu0
        %v562 = vadd.f32 0.0, %v561
        %563 = vmatmul.bf16.gmra.mxu0 %v459
        %v564 = vpop.f32.mrf.mxu0
        %v565 = vadd.f32 0.0, %v564
        %v566 = vpop.f32.mrf.mxu0
        %v567 = vadd.f32 0.0, %v566
        %568 = vmatmul.bf16.gmra.mxu0 %v462
        %v569 = vpop.f32.mrf.mxu0
        %v570 = vadd.f32 0.0, %v569
        %v571 = vpop.f32.mrf.mxu0
        %v572 = vadd.f32 0.0, %v571
        %573 = vmatmul.bf16.gmra.mxu0 %v465
        %v574 = vpop.f32.mrf.mxu0
        %v575 = vadd.f32 0.0, %v574
        %v576 = vpop.f32.mrf.mxu0
        %v577 = vadd.f32 0.0, %v576
        %578 = vmatmul.bf16.gmra.mxu0 %v468
        %v579 = vpop.f32.mrf.mxu0
        %v580 = vadd.f32 0.0, %v579
        %v581 = vpop.f32.mrf.mxu0
        %v582 = vadd.f32 0.0, %v581
        %583 = vmatmul.bf16.gmra.mxu0 %v471
        %v584 = vpop.f32.mrf.mxu0
        %v585 = vadd.f32 0.0, %v584
        %v586 = vpop.f32.mrf.mxu0
        %v587 = vadd.f32 0.0, %v586
        %588 = vmatmul.bf16.gmra.mxu0 %v474
        %v589 = vpop.f32.mrf.mxu0
        %v590 = vadd.f32 0.0, %v589
        %v591 = vpop.f32.mrf.mxu0
        %v592 = vadd.f32 0.0, %v591
        %593 = vmatmul.bf16.gmra.mxu0 %v477
        %v594 = vpop.f32.mrf.mxu0
        %v595 = vadd.f32 0.0, %v594
        %v596 = vpop.f32.mrf.mxu0
        %v597 = vadd.f32 0.0, %v596
        %598 = vmatmul.bf16.gmra.mxu0 %v480
        %v599 = vpop.f32.mrf.mxu0
        %v600 = vadd.f32 0.0, %v599
        %v601 = vpop.f32.mrf.mxu0
        %602 = vdwg.mxu0
        %603 = vmatpush.bf16.xpose.msra.mxu0 %v528
        %604 = vmatpush.bf16.xpose.msra.mxu0 %v525
        %605 = vmatpush.bf16.xpose.msra.mxu0 %v522
        %606 = vmatpush.bf16.xpose.msra.mxu0 %v519
        %607 = vmatpush.bf16.xpose.msra.mxu0 %v516
        %608 = vmatpush.bf16.xpose.msra.mxu0 %v513
        %609 = vmatpush.bf16.xpose.msra.mxu0 %v510
        %610 = vmatpush.bf16.xpose.msra.mxu0 %v507
        %611 = vmatmul.bf16.gmra.mxu0 %v444
        %v612 = vpop.f32.mrf.mxu0
        %v613 = vadd.f32 0.0, %v612
        %v614 = vpop.f32.mrf.mxu0
        %v615 = vadd.f32 0.0, %v614
        %616 = vmatmul.bf16.gmra.mxu0 %v447
        %v617 = vpop.f32.mrf.mxu0
        %v618 = vadd.f32 0.0, %v617
        %v619 = vpop.f32.mrf.mxu0
        %v620 = vadd.f32 0.0, %v619
        %621 = vmatmul.bf16.gmra.mxu0 %v450
        %v622 = vpop.f32.mrf.mxu0
        %v623 = vadd.f32 0.0, %v622
        %v624 = vpop.f32.mrf.mxu0
        %v625 = vadd.f32 0.0, %v624
        %626 = vmatmul.bf16.gmra.mxu0 %v453
        %v627 = vpop.f32.mrf.mxu0
        %v628 = vadd.f32 0.0, %v627
        %v629 = vpop.f32.mrf.mxu0
        %v630 = vadd.f32 0.0, %v629
        %631 = vmatmul.bf16.gmra.mxu0 %v456
        %v632 = vpop.f32.mrf.mxu0
        %v633 = vadd.f32 0.0, %v632
        %v634 = vpop.f32.mrf.mxu0
        %v635 = vadd.f32 0.0, %v634
        %636 = vmatmul.bf16.gmra.mxu0 %v459
        %v637 = vpop.f32.mrf.mxu0
        %v638 = vadd.f32 0.0, %v637
        %v639 = vpop.f32.mrf.mxu0
        %v640 = vadd.f32 0.0, %v639
        %641 = vmatmul.bf16.gmra.mxu0 %v462
        %v642 = vpop.f32.mrf.mxu0
        %v643 = vadd.f32 0.0, %v642
        %v644 = vpop.f32.mrf.mxu0
        %v645 = vadd.f32 0.0, %v644
        %646 = vmatmul.bf16.gmra.mxu0 %v465
        %v647 = vpop.f32.mrf.mxu0
        %v648 = vadd.f32 0.0, %v647
        %v649 = vpop.f32.mrf.mxu0
        %v650 = vadd.f32 0.0, %v649
        %651 = vmatmul.bf16.gmra.mxu0 %v468
        %v652 = vpop.f32.mrf.mxu0
        %v653 = vadd.f32 0.0, %v652
        %v654 = vpop.f32.mrf.mxu0
        %v655 = vadd.f32 0.0, %v654
        %656 = vmatmul.bf16.gmra.mxu0 %v471
        %v657 = vpop.f32.mrf.mxu0
        %v658 = vadd.f32 0.0, %v657
        %v659 = vpop.f32.mrf.mxu0
        %v660 = vadd.f32 0.0, %v659
        %661 = vmatmul.bf16.gmra.mxu0 %v474
        %v662 = vpop.f32.mrf.mxu0
        %v663 = vadd.f32 0.0, %v662
        %v664 = vpop.f32.mrf.mxu0
        %v665 = vadd.f32 0.0, %v664
        %666 = vmatmul.bf16.gmra.mxu0 %v477
        %v667 = vpop.f32.mrf.mxu0
        %v668 = vadd.f32 0.0, %v667
        %v669 = vpop.f32.mrf.mxu0
        %v670 = vadd.f32 0.0, %v669
        %671 = vmatmul.bf16.gmra.mxu0 %v480
        %v672 = vpop.f32.mrf.mxu0
        %v673 = vadd.f32 0.0, %v672
        %v674 = vpop.f32.mrf.mxu0
        %675 = vdwg.mxu0
        %v676 = vpack.c.bf16 %v613, %v540
        %v677 = vpack.c.bf16 %v615, %v542
        %v678 = vpack.c.bf16 %v618, %v545
        %v679 = vpack.c.bf16 %v620, %v547
        %v680 = vpack.c.bf16 %v623, %v550
        %v681 = vpack.c.bf16 %v625, %v552
        %v682 = vpack.c.bf16 %v628, %v555
        %v683 = vpack.c.bf16 %v630, %v557
        %v684 = vpack.c.bf16 %v633, %v560
        %v685 = vpack.c.bf16 %v635, %v562
        %v686 = vpack.c.bf16 %v638, %v565
        %v687 = vpack.c.bf16 %v640, %v567
        %v688 = vpack.c.bf16 %v643, %v570
        %v689 = vpack.c.bf16 %v645, %v572
        %v690 = vpack.c.bf16 %v648, %v575
        %v691 = vpack.c.bf16 %v650, %v577
        %v692 = vpack.c.bf16 %v653, %v580
        %v693 = vpack.c.bf16 %v655, %v582
        %v694 = vpack.c.bf16 %v658, %v585
        %v695 = vpack.c.bf16 %v660, %v587
        %v696 = vpack.c.bf16 %v663, %v590
        %v697 = vpack.c.bf16 %v665, %v592
        %v698 = vpack.c.bf16 %v668, %v595
        %v699 = vpack.c.bf16 %v670, %v597
        %v700 = vpack.c.bf16 %v673, %v600
        %v701 = vld [vmem:[%s2] sm:$0xf]
        %v702 = vld [vmem:[%s2 + $0x4] sm:$0xf]
        %v703 = vld [vmem:[%s2 + $0x8] sm:$0xf]
        %v704 = vld [vmem:[%s2 + $0xc] sm:$0xf]
        %v705 = vld [vmem:[%s2 + $0x10] sm:$0xf]
        %v706 = vld [vmem:[%s2 + $0x14] sm:$0xf]
        %v707 = vld [vmem:[%s2 + $0x18] sm:$0xf]
        %v708 = vld [vmem:[%s2 + $0x1c] sm:$0xf]
        %v709 = vld [vmem:[%s2 + $0x20] sm:$0xf]
        %v710 = vld [vmem:[%s2 + $0x24] sm:$0xf]
        %v711 = vld [vmem:[%s2 + $0x28] sm:$0xf]
        %v712 = vld [vmem:[%s2 + $0x2c] sm:$0xf]
        %v713 = vld [vmem:[%s2 + $0x30] sm:$0xf]
        %v714 = vld [vmem:[%s2 + $0x34] sm:$0xf]
        %v715 = vld [vmem:[%s2 + $0x38] sm:$0xf]
        %v716 = vld [vmem:[%s2 + $0x3c] sm:$0xf]
        %v717 = vld [vmem:[%s2 + $0x40] sm:$0xf]
        %v718 = vld [vmem:[%s2 + $0x44] sm:$0xf]
        %v719 = vld [vmem:[%s2 + $0x48] sm:$0xf]
        %v720 = vld [vmem:[%s2 + $0x4c] sm:$0xf]
        %v721 = vld [vmem:[%s2 + $0x50] sm:$0xf]
        %v722 = vld [vmem:[%s2 + $0x54] sm:$0xf]
        %v723 = vld [vmem:[%s2 + $0x58] sm:$0xf]
        %v724 = vld [vmem:[%s2 + $0x5c] sm:$0xf]
        %v725 = vld [vmem:[%s2 + $0x60] sm:$0xf]
        %727 = vset.pattern.permute.xlu0 0
        %728 = vperm.xlu0 %727, %v701
        %v729 = vpop.permute.xlu0 %728
        %v732 = vunpack.c.l.s4 839922192
        %v733 = vunpack.c.0.s8 %v732
        %v734 = vperm.slane %v729, %v733
        %736 = vset.pattern.permute.xlu0 0
        %737 = vperm.xlu0 %736, %v702
        %v738 = vpop.permute.xlu0 %737
        %v741 = vunpack.c.l.s4 839922192
        %v742 = vunpack.c.0.s8 %v741
        %v743 = vperm.slane %v738, %v742
        %745 = vset.pattern.permute.xlu0 0
        %746 = vperm.xlu0 %745, %v703
        %v747 = vpop.permute.xlu0 %746
        %v750 = vunpack.c.l.s4 839922192
        %v751 = vunpack.c.0.s8 %v750
        %v752 = vperm.slane %v747, %v751
        %754 = vset.pattern.permute.xlu0 0
        %755 = vperm.xlu0 %754, %v704
        %v756 = vpop.permute.xlu0 %755
        %v759 = vunpack.c.l.s4 839922192
        %v760 = vunpack.c.0.s8 %v759
        %v761 = vperm.slane %v756, %v760
        %763 = vset.pattern.permute.xlu0 0
        %764 = vperm.xlu0 %763, %v705
        %v765 = vpop.permute.xlu0 %764
        %v768 = vunpack.c.l.s4 839922192
        %v769 = vunpack.c.0.s8 %v768
        %v770 = vperm.slane %v765, %v769
        %772 = vset.pattern.permute.xlu0 0
        %773 = vperm.xlu0 %772, %v706
        %v774 = vpop.permute.xlu0 %773
        %v777 = vunpack.c.l.s4 839922192
        %v778 = vunpack.c.0.s8 %v777
        %v779 = vperm.slane %v774, %v778
        %781 = vset.pattern.permute.xlu0 0
        %782 = vperm.xlu0 %781, %v707
        %v783 = vpop.permute.xlu0 %782
        %v786 = vunpack.c.l.s4 839922192
        %v787 = vunpack.c.0.s8 %v786
        %v788 = vperm.slane %v783, %v787
        %790 = vset.pattern.permute.xlu0 0
        %791 = vperm.xlu0 %790, %v708
        %v792 = vpop.permute.xlu0 %791
        %v795 = vunpack.c.l.s4 839922192
        %v796 = vunpack.c.0.s8 %v795
        %v797 = vperm.slane %v792, %v796
        %799 = vset.pattern.permute.xlu0 0
        %800 = vperm.xlu0 %799, %v709
        %v801 = vpop.permute.xlu0 %800
        %v804 = vunpack.c.l.s4 839922192
        %v805 = vunpack.c.0.s8 %v804
        %v806 = vperm.slane %v801, %v805
        %808 = vset.pattern.permute.xlu0 0
        %809 = vperm.xlu0 %808, %v710
        %v810 = vpop.permute.xlu0 %809
        %v813 = vunpack.c.l.s4 839922192
        %v814 = vunpack.c.0.s8 %v813
        %v815 = vperm.slane %v810, %v814
        %817 = vset.pattern.permute.xlu0 0
        %818 = vperm.xlu0 %817, %v711
        %v819 = vpop.permute.xlu0 %818
        %v822 = vunpack.c.l.s4 839922192
        %v823 = vunpack.c.0.s8 %v822
        %v824 = vperm.slane %v819, %v823
        %826 = vset.pattern.permute.xlu0 0
        %827 = vperm.xlu0 %826, %v712
        %v828 = vpop.permute.xlu0 %827
        %v831 = vunpack.c.l.s4 839922192
        %v832 = vunpack.c.0.s8 %v831
        %v833 = vperm.slane %v828, %v832
        %835 = vset.pattern.permute.xlu0 0
        %836 = vperm.xlu0 %835, %v713
        %v837 = vpop.permute.xlu0 %836
        %v840 = vunpack.c.l.s4 839922192
        %v841 = vunpack.c.0.s8 %v840
        %v842 = vperm.slane %v837, %v841
        %844 = vset.pattern.permute.xlu0 0
        %845 = vperm.xlu0 %844, %v714
        %v846 = vpop.permute.xlu0 %845
        %v849 = vunpack.c.l.s4 839922192
        %v850 = vunpack.c.0.s8 %v849
        %v851 = vperm.slane %v846, %v850
        %853 = vset.pattern.permute.xlu0 0
        %854 = vperm.xlu0 %853, %v715
        %v855 = vpop.permute.xlu0 %854
        %v858 = vunpack.c.l.s4 839922192
        %v859 = vunpack.c.0.s8 %v858
        %v860 = vperm.slane %v855, %v859
        %862 = vset.pattern.permute.xlu0 0
        %863 = vperm.xlu0 %862, %v716
        %v864 = vpop.permute.xlu0 %863
        %v867 = vunpack.c.l.s4 839922192
        %v868 = vunpack.c.0.s8 %v867
        %v869 = vperm.slane %v864, %v868
        %871 = vset.pattern.permute.xlu0 0
        %872 = vperm.xlu0 %871, %v717
        %v873 = vpop.permute.xlu0 %872
        %v876 = vunpack.c.l.s4 839922192
        %v877 = vunpack.c.0.s8 %v876
        %v878 = vperm.slane %v873, %v877
        %880 = vset.pattern.permute.xlu0 0
        %881 = vperm.xlu0 %880, %v718
        %v882 = vpop.permute.xlu0 %881
        %v885 = vunpack.c.l.s4 839922192
        %v886 = vunpack.c.0.s8 %v885
        %v887 = vperm.slane %v882, %v886
        %889 = vset.pattern.permute.xlu0 0
        %890 = vperm.xlu0 %889, %v719
        %v891 = vpop.permute.xlu0 %890
        %v894 = vunpack.c.l.s4 839922192
        %v895 = vunpack.c.0.s8 %v894
        %v896 = vperm.slane %v891, %v895
        %898 = vset.pattern.permute.xlu0 0
        %899 = vperm.xlu0 %898, %v720
        %v900 = vpop.permute.xlu0 %899
        %v903 = vunpack.c.l.s4 839922192
        %v904 = vunpack.c.0.s8 %v903
        %v905 = vperm.slane %v900, %v904
        %907 = vset.pattern.permute.xlu0 0
        %908 = vperm.xlu0 %907, %v721
        %v909 = vpop.permute.xlu0 %908
        %v912 = vunpack.c.l.s4 839922192
        %v913 = vunpack.c.0.s8 %v912
        %v914 = vperm.slane %v909, %v913
        %916 = vset.pattern.permute.xlu0 0
        %917 = vperm.xlu0 %916, %v722
        %v918 = vpop.permute.xlu0 %917
        %v921 = vunpack.c.l.s4 839922192
        %v922 = vunpack.c.0.s8 %v921
        %v923 = vperm.slane %v918, %v922
        %925 = vset.pattern.permute.xlu0 0
        %926 = vperm.xlu0 %925, %v723
        %v927 = vpop.permute.xlu0 %926
        %v930 = vunpack.c.l.s4 839922192
        %v931 = vunpack.c.0.s8 %v930
        %v932 = vperm.slane %v927, %v931
        %934 = vset.pattern.permute.xlu0 0
        %935 = vperm.xlu0 %934, %v724
        %v936 = vpop.permute.xlu0 %935
        %v939 = vunpack.c.l.s4 839922192
        %v940 = vunpack.c.0.s8 %v939
        %v941 = vperm.slane %v936, %v940
        %943 = vset.pattern.permute.xlu0 0
        %944 = vperm.xlu0 %943, %v725
        %v945 = vpop.permute.xlu0 %944
        %v948 = vunpack.c.l.s4 839922192
        %v949 = vunpack.c.0.s8 %v948
        %v950 = vperm.slane %v945, %v949
        %v951 = vunpack.c.l.bf16 %v676
        %v952 = vunpack.c.h.bf16 %v676
        %v953 = vunpack.c.l.bf16 %v677
        %v954 = vunpack.c.h.bf16 %v677
        %v955 = vunpack.c.l.bf16 %v678
        %v956 = vunpack.c.h.bf16 %v678
        %v957 = vunpack.c.l.bf16 %v679
        %v958 = vunpack.c.h.bf16 %v679
        %v959 = vunpack.c.l.bf16 %v680
        %v960 = vunpack.c.h.bf16 %v680
        %v961 = vunpack.c.l.bf16 %v681
        %v962 = vunpack.c.h.bf16 %v681
        %v963 = vunpack.c.l.bf16 %v682
        %v964 = vunpack.c.h.bf16 %v682
        %v965 = vunpack.c.l.bf16 %v683
        %v966 = vunpack.c.h.bf16 %v683
        %v967 = vunpack.c.l.bf16 %v684
        %v968 = vunpack.c.h.bf16 %v684
        %v969 = vunpack.c.l.bf16 %v685
        %v970 = vunpack.c.h.bf16 %v685
        %v971 = vunpack.c.l.bf16 %v686
        %v972 = vunpack.c.h.bf16 %v686
        %v973 = vunpack.c.l.bf16 %v687
        %v974 = vunpack.c.h.bf16 %v687
        %v975 = vunpack.c.l.bf16 %v688
        %v976 = vunpack.c.h.bf16 %v688
        %v977 = vunpack.c.l.bf16 %v689
        %v978 = vunpack.c.h.bf16 %v689
        %v979 = vunpack.c.l.bf16 %v690
        %v980 = vunpack.c.h.bf16 %v690
        %v981 = vunpack.c.l.bf16 %v691
        %v982 = vunpack.c.h.bf16 %v691
        %v983 = vunpack.c.l.bf16 %v692
        %v984 = vunpack.c.h.bf16 %v692
        %v985 = vunpack.c.l.bf16 %v693
        %v986 = vunpack.c.h.bf16 %v693
        %v987 = vunpack.c.l.bf16 %v694
        %v988 = vunpack.c.h.bf16 %v694
        %v989 = vunpack.c.l.bf16 %v695
        %v990 = vunpack.c.h.bf16 %v695
        %v991 = vunpack.c.l.bf16 %v696
        %v992 = vunpack.c.h.bf16 %v696
        %v993 = vunpack.c.l.bf16 %v697
        %v994 = vunpack.c.h.bf16 %v697
        %v995 = vunpack.c.l.bf16 %v698
        %v996 = vunpack.c.h.bf16 %v698
        %v997 = vunpack.c.l.bf16 %v699
        %v998 = vunpack.c.h.bf16 %v699
        %v999 = vunpack.c.l.bf16 %v700
        %v1000 = vunpack.c.h.bf16 %v700
        %v1001 = vunpack.c.l.bf16 %v734
        %v1002 = vunpack.c.l.bf16 %v743
        %v1003 = vunpack.c.l.bf16 %v752
        %v1004 = vunpack.c.l.bf16 %v761
        %v1005 = vunpack.c.l.bf16 %v770
        %v1006 = vunpack.c.l.bf16 %v779
        %v1007 = vunpack.c.l.bf16 %v788
        %v1008 = vunpack.c.l.bf16 %v797
        %v1009 = vunpack.c.l.bf16 %v806
        %v1010 = vunpack.c.l.bf16 %v815
        %v1011 = vunpack.c.l.bf16 %v824
        %v1012 = vunpack.c.l.bf16 %v833
        %v1013 = vunpack.c.l.bf16 %v842
        %v1014 = vunpack.c.l.bf16 %v851
        %v1015 = vunpack.c.l.bf16 %v860
        %v1016 = vunpack.c.l.bf16 %v869
        %v1017 = vunpack.c.l.bf16 %v878
        %v1018 = vunpack.c.l.bf16 %v887
        %v1019 = vunpack.c.l.bf16 %v896
        %v1020 = vunpack.c.l.bf16 %v905
        %v1021 = vunpack.c.l.bf16 %v914
        %v1022 = vunpack.c.l.bf16 %v923
        %v1023 = vunpack.c.l.bf16 %v932
        %v1024 = vunpack.c.l.bf16 %v941
        %v1025 = vunpack.c.l.bf16 %v950
        %v1026 = vadd.f32 %v951, %v1001
        %v1027 = vadd.f32 %v952, %v1001
        %v1028 = vadd.f32 %v953, %v1002
        %v1029 = vadd.f32 %v954, %v1002
        %v1030 = vadd.f32 %v955, %v1003
        %v1031 = vadd.f32 %v956, %v1003
        %v1032 = vadd.f32 %v957, %v1004
        %v1033 = vadd.f32 %v958, %v1004
        %v1034 = vadd.f32 %v959, %v1005
        %v1035 = vadd.f32 %v960, %v1005
        %v1036 = vadd.f32 %v961, %v1006
        %v1037 = vadd.f32 %v962, %v1006
        %v1038 = vadd.f32 %v963, %v1007
        %v1039 = vadd.f32 %v964, %v1007
        %v1040 = vadd.f32 %v965, %v1008
        %v1041 = vadd.f32 %v966, %v1008
        %v1042 = vadd.f32 %v967, %v1009
        %v1043 = vadd.f32 %v968, %v1009
        %v1044 = vadd.f32 %v969, %v1010
        %v1045 = vadd.f32 %v970, %v1010
        %v1046 = vadd.f32 %v971, %v1011
        %v1047 = vadd.f32 %v972, %v1011
        %v1048 = vadd.f32 %v973, %v1012
        %v1049 = vadd.f32 %v974, %v1012
        %v1050 = vadd.f32 %v975, %v1013
        %v1051 = vadd.f32 %v976, %v1013
        %v1052 = vadd.f32 %v977, %v1014
        %v1053 = vadd.f32 %v978, %v1014
        %v1054 = vadd.f32 %v979, %v1015
        %v1055 = vadd.f32 %v980, %v1015
        %v1056 = vadd.f32 %v981, %v1016
        %v1057 = vadd.f32 %v982, %v1016
        %v1058 = vadd.f32 %v983, %v1017
        %v1059 = vadd.f32 %v984, %v1017
        %v1060 = vadd.f32 %v985, %v1018
        %v1061 = vadd.f32 %v986, %v1018
        %v1062 = vadd.f32 %v987, %v1019
        %v1063 = vadd.f32 %v988, %v1019
        %v1064 = vadd.f32 %v989, %v1020
        %v1065 = vadd.f32 %v990, %v1020
        %v1066 = vadd.f32 %v991, %v1021
        %v1067 = vadd.f32 %v992, %v1021
        %v1068 = vadd.f32 %v993, %v1022
        %v1069 = vadd.f32 %v994, %v1022
        %v1070 = vadd.f32 %v995, %v1023
        %v1071 = vadd.f32 %v996, %v1023
        %v1072 = vadd.f32 %v997, %v1024
        %v1073 = vadd.f32 %v998, %v1024
        %v1074 = vadd.f32 %v999, %v1025
        %v1075 = vadd.f32 %v1000, %v1025
        %v1076 = vpack.c.bf16 %v1027, %v1026
        %v1077 = vpack.c.bf16 %v1029, %v1028
        %v1078 = vpack.c.bf16 %v1031, %v1030
        %v1079 = vpack.c.bf16 %v1033, %v1032
        %v1080 = vpack.c.bf16 %v1035, %v1034
        %v1081 = vpack.c.bf16 %v1037, %v1036
        %v1082 = vpack.c.bf16 %v1039, %v1038
        %v1083 = vpack.c.bf16 %v1041, %v1040
        %v1084 = vpack.c.bf16 %v1043, %v1042
        %v1085 = vpack.c.bf16 %v1045, %v1044
        %v1086 = vpack.c.bf16 %v1047, %v1046
        %v1087 = vpack.c.bf16 %v1049, %v1048
        %v1088 = vpack.c.bf16 %v1051, %v1050
        %v1089 = vpack.c.bf16 %v1053, %v1052
        %v1090 = vpack.c.bf16 %v1055, %v1054
        %v1091 = vpack.c.bf16 %v1057, %v1056
        %v1092 = vpack.c.bf16 %v1059, %v1058
        %v1093 = vpack.c.bf16 %v1061, %v1060
        %v1094 = vpack.c.bf16 %v1063, %v1062
        %v1095 = vpack.c.bf16 %v1065, %v1064
        %v1096 = vpack.c.bf16 %v1067, %v1066
        %v1097 = vpack.c.bf16 %v1069, %v1068
        %v1098 = vpack.c.bf16 %v1071, %v1070
        %v1099 = vpack.c.bf16 %v1073, %v1072
        %v1100 = vpack.c.bf16 %v1075, %v1074
        %v1101 = vunpack.c.l.bf16 %v1076
        %v1102 = vunpack.c.h.bf16 %v1076
        %v1103 = vunpack.c.l.bf16 %v1077
        %v1104 = vunpack.c.h.bf16 %v1077
        %v1105 = vunpack.c.l.bf16 %v1078
        %v1106 = vunpack.c.h.bf16 %v1078
        %v1107 = vunpack.c.l.bf16 %v1079
        %v1108 = vunpack.c.h.bf16 %v1079
        %v1109 = vunpack.c.l.bf16 %v1080
        %v1110 = vunpack.c.h.bf16 %v1080
        %v1111 = vunpack.c.l.bf16 %v1081
        %v1112 = vunpack.c.h.bf16 %v1081
        %v1113 = vunpack.c.l.bf16 %v1082
        %v1114 = vunpack.c.h.bf16 %v1082
        %v1115 = vunpack.c.l.bf16 %v1083
        %v1116 = vunpack.c.h.bf16 %v1083
        %v1117 = vunpack.c.l.bf16 %v1084
        %v1118 = vunpack.c.h.bf16 %v1084
        %v1119 = vunpack.c.l.bf16 %v1085
        %v1120 = vunpack.c.h.bf16 %v1085
        %v1121 = vunpack.c.l.bf16 %v1086
        %v1122 = vunpack.c.h.bf16 %v1086
        %v1123 = vunpack.c.l.bf16 %v1087
        %v1124 = vunpack.c.h.bf16 %v1087
        %v1125 = vunpack.c.l.bf16 %v1088
        %v1126 = vunpack.c.h.bf16 %v1088
        %v1127 = vunpack.c.l.bf16 %v1089
        %v1128 = vunpack.c.h.bf16 %v1089
        %v1129 = vunpack.c.l.bf16 %v1090
        %v1130 = vunpack.c.h.bf16 %v1090
        %v1131 = vunpack.c.l.bf16 %v1091
        %v1132 = vunpack.c.h.bf16 %v1091
        %v1133 = vunpack.c.l.bf16 %v1092
        %v1134 = vunpack.c.h.bf16 %v1092
        %v1135 = vunpack.c.l.bf16 %v1093
        %v1136 = vunpack.c.h.bf16 %v1093
        %v1137 = vunpack.c.l.bf16 %v1094
        %v1138 = vunpack.c.h.bf16 %v1094
        %v1139 = vunpack.c.l.bf16 %v1095
        %v1140 = vunpack.c.h.bf16 %v1095
        %v1141 = vunpack.c.l.bf16 %v1096
        %v1142 = vunpack.c.h.bf16 %v1096
        %v1143 = vunpack.c.l.bf16 %v1097
        %v1144 = vunpack.c.h.bf16 %v1097
        %v1145 = vunpack.c.l.bf16 %v1098
        %v1146 = vunpack.c.h.bf16 %v1098
        %v1147 = vunpack.c.l.bf16 %v1099
        %v1148 = vunpack.c.h.bf16 %v1099
        %v1149 = vunpack.c.l.bf16 %v1100
        %v1150 = vunpack.c.h.bf16 %v1100
        %v1151 = vmax.f32 %v1101, 0.0
        %v1152 = vmax.f32 %v1102, 0.0
        %v1153 = vmax.f32 %v1103, 0.0
        %v1154 = vmax.f32 %v1104, 0.0
        %v1155 = vmax.f32 %v1105, 0.0
        %v1156 = vmax.f32 %v1106, 0.0
        %v1157 = vmax.f32 %v1107, 0.0
        %v1158 = vmax.f32 %v1108, 0.0
        %v1159 = vmax.f32 %v1109, 0.0
        %v1160 = vmax.f32 %v1110, 0.0
        %v1161 = vmax.f32 %v1111, 0.0
        %v1162 = vmax.f32 %v1112, 0.0
        %v1163 = vmax.f32 %v1113, 0.0
        %v1164 = vmax.f32 %v1114, 0.0
        %v1165 = vmax.f32 %v1115, 0.0
        %v1166 = vmax.f32 %v1116, 0.0
        %v1167 = vmax.f32 %v1117, 0.0
        %v1168 = vmax.f32 %v1118, 0.0
        %v1169 = vmax.f32 %v1119, 0.0
        %v1170 = vmax.f32 %v1120, 0.0
        %v1171 = vmax.f32 %v1121, 0.0
        %v1172 = vmax.f32 %v1122, 0.0
        %v1173 = vmax.f32 %v1123, 0.0
        %v1174 = vmax.f32 %v1124, 0.0
        %v1175 = vmax.f32 %v1125, 0.0
        %v1176 = vmax.f32 %v1126, 0.0
        %v1177 = vmax.f32 %v1127, 0.0
        %v1178 = vmax.f32 %v1128, 0.0
        %v1179 = vmax.f32 %v1129, 0.0
        %v1180 = vmax.f32 %v1130, 0.0
        %v1181 = vmax.f32 %v1131, 0.0
        %v1182 = vmax.f32 %v1132, 0.0
        %v1183 = vmax.f32 %v1133, 0.0
        %v1184 = vmax.f32 %v1134, 0.0
        %v1185 = vmax.f32 %v1135, 0.0
        %v1186 = vmax.f32 %v1136, 0.0
        %v1187 = vmax.f32 %v1137, 0.0
        %v1188 = vmax.f32 %v1138, 0.0
        %v1189 = vmax.f32 %v1139, 0.0
        %v1190 = vmax.f32 %v1140, 0.0
        %v1191 = vmax.f32 %v1141, 0.0
        %v1192 = vmax.f32 %v1142, 0.0
        %v1193 = vmax.f32 %v1143, 0.0
        %v1194 = vmax.f32 %v1144, 0.0
        %v1195 = vmax.f32 %v1145, 0.0
        %v1196 = vmax.f32 %v1146, 0.0
        %v1197 = vmax.f32 %v1147, 0.0
        %v1198 = vmax.f32 %v1148, 0.0
        %v1199 = vmax.f32 %v1149, 0.0
        %v1200 = vmax.f32 %v1150, 0.0
        %v1201 = vpack.c.bf16 %v1153, %v1151
        %v1202 = vpack.c.bf16 %v1154, %v1152
        %v1203 = vpack.c.bf16 %v1157, %v1155
        %v1204 = vpack.c.bf16 %v1158, %v1156
        %v1205 = vpack.c.bf16 %v1161, %v1159
        %v1206 = vpack.c.bf16 %v1162, %v1160
        %v1207 = vpack.c.bf16 %v1165, %v1163
        %v1208 = vpack.c.bf16 %v1166, %v1164
        %v1209 = vpack.c.bf16 %v1169, %v1167
        %v1210 = vpack.c.bf16 %v1170, %v1168
        %v1211 = vpack.c.bf16 %v1173, %v1171
        %v1212 = vpack.c.bf16 %v1174, %v1172
        %v1213 = vpack.c.bf16 %v1177, %v1175
        %v1214 = vpack.c.bf16 %v1178, %v1176
        %v1215 = vpack.c.bf16 %v1181, %v1179
        %v1216 = vpack.c.bf16 %v1182, %v1180
        %v1217 = vpack.c.bf16 %v1185, %v1183
        %v1218 = vpack.c.bf16 %v1186, %v1184
        %v1219 = vpack.c.bf16 %v1189, %v1187
        %v1220 = vpack.c.bf16 %v1190, %v1188
        %v1221 = vpack.c.bf16 %v1193, %v1191
        %v1222 = vpack.c.bf16 %v1194, %v1192
        %v1223 = vpack.c.bf16 %v1197, %v1195
        %v1224 = vpack.c.bf16 %v1198, %v1196
        %v1225 = vpack.c.bf16 %v1199, %v1199
        %v1226 = vpack.c.bf16 %v1200, %v1200
        %v1227 = vld [vmem:[%s3] sm:$0xff]
        %v1228 = vld [vmem:[%s3 + $0x8] sm:$0xff]
        %v1229 = vld [vmem:[%s3 + $0x10] sm:$0xff]
        %v1230 = vld [vmem:[%s3 + $0x18] sm:$0xff]
        %v1231 = vld [vmem:[%s3 + $0x20] sm:$0xff]
        %v1232 = vld [vmem:[%s3 + $0x28] sm:$0xff]
        %v1233 = vld [vmem:[%s3 + $0x30] sm:$0xff]
        %v1234 = vld [vmem:[%s3 + $0x38] sm:$0xff]
        %v1235 = vld [vmem:[%s3 + $0x40] sm:$0xff]
        %v1236 = vld [vmem:[%s3 + $0x48] sm:$0xff]
        %v1237 = vld [vmem:[%s3 + $0x50] sm:$0xff]
        %v1238 = vld [vmem:[%s3 + $0x58] sm:$0xff]
        %v1239 = vld [vmem:[%s3 + $0x60] sm:$0xff]
        %v1240 = vld [vmem:[%s3 + $0x68] sm:$0xff]
        %v1241 = vld [vmem:[%s3 + $0x70] sm:$0xff]
        %v1242 = vld [vmem:[%s3 + $0x78] sm:$0xff]
        %v1243 = vld [vmem:[%s3 + $0x80] sm:$0xff]
        %v1244 = vld [vmem:[%s3 + $0x88] sm:$0xff]
        %v1245 = vld [vmem:[%s3 + $0x90] sm:$0xff]
        %v1246 = vld [vmem:[%s3 + $0x98] sm:$0xff]
        %v1247 = vld [vmem:[%s3 + $0xa0] sm:$0xff]
        %v1248 = vld [vmem:[%s3 + $0xa8] sm:$0xff]
        %v1249 = vld [vmem:[%s3 + $0xb0] sm:$0xff]
        %v1250 = vld [vmem:[%s3 + $0xb8] sm:$0xff]
        %v1251 = vld [vmem:[%s3 + $0xc0] sm:$0xff]
        %v1277 = vunpack.c.l.b16 %v1227
        %v1278 = vunpack.c.h.b16 %v1227
        %v1279 = vunpack.c.l.b16 %v1228
        %v1280 = vunpack.c.h.b16 %v1228
        %v1281 = vunpack.c.l.b16 %v1229
        %v1282 = vunpack.c.h.b16 %v1229
        %v1283 = vunpack.c.l.b16 %v1230
        %v1284 = vunpack.c.h.b16 %v1230
        %v1285 = vunpack.c.l.b16 %v1231
        %v1286 = vunpack.c.h.b16 %v1231
        %v1287 = vunpack.c.l.b16 %v1232
        %v1288 = vunpack.c.h.b16 %v1232
        %v1289 = vunpack.c.l.b16 %v1233
        %v1290 = vunpack.c.h.b16 %v1233
        %v1291 = vunpack.c.l.b16 %v1234
        %v1292 = vunpack.c.h.b16 %v1234
        %v1293 = vunpack.c.l.b16 %v1235
        %v1294 = vunpack.c.h.b16 %v1235
        %v1295 = vunpack.c.l.b16 %v1236
        %v1296 = vunpack.c.h.b16 %v1236
        %v1297 = vunpack.c.l.b16 %v1237
        %v1298 = vunpack.c.h.b16 %v1237
        %v1299 = vunpack.c.l.b16 %v1238
        %v1300 = vunpack.c.h.b16 %v1238
        %v1301 = vunpack.c.l.b16 %v1239
        %v1302 = vunpack.c.h.b16 %v1239
        %v1303 = vunpack.c.l.b16 %v1240
        %v1304 = vunpack.c.h.b16 %v1240
        %v1305 = vunpack.c.l.b16 %v1241
        %v1306 = vunpack.c.h.b16 %v1241
        %v1307 = vunpack.c.l.b16 %v1242
        %v1308 = vunpack.c.h.b16 %v1242
        %v1309 = vunpack.c.l.b16 %v1243
        %v1310 = vunpack.c.h.b16 %v1243
        %v1311 = vunpack.c.l.b16 %v1244
        %v1312 = vunpack.c.h.b16 %v1244
        %v1313 = vunpack.c.l.b16 %v1245
        %v1314 = vunpack.c.h.b16 %v1245
        %v1315 = vunpack.c.l.b16 %v1246
        %v1316 = vunpack.c.h.b16 %v1246
        %v1317 = vunpack.c.l.b16 %v1247
        %v1318 = vunpack.c.h.b16 %v1247
        %v1319 = vunpack.c.l.b16 %v1248
        %v1320 = vunpack.c.h.b16 %v1248
        %v1321 = vunpack.c.l.b16 %v1249
        %v1322 = vunpack.c.h.b16 %v1249
        %v1323 = vunpack.c.l.b16 %v1250
        %v1324 = vunpack.c.h.b16 %v1250
        %v1325 = vunpack.c.l.b16 %v1251
        %v1326 = vunpack.c.h.b16 %v1251
        %v1327 = vpack.c.b16 %v1279, %v1277
        %v1328 = vpack.c.b16 %v1280, %v1278
        %v1329 = vpack.c.b16 %v1283, %v1281
        %v1330 = vpack.c.b16 %v1284, %v1282
        %v1331 = vpack.c.b16 %v1287, %v1285
        %v1332 = vpack.c.b16 %v1288, %v1286
        %v1333 = vpack.c.b16 %v1291, %v1289
        %v1334 = vpack.c.b16 %v1292, %v1290
        %v1335 = vpack.c.b16 %v1295, %v1293
        %v1336 = vpack.c.b16 %v1296, %v1294
        %v1337 = vpack.c.b16 %v1299, %v1297
        %v1338 = vpack.c.b16 %v1300, %v1298
        %v1339 = vpack.c.b16 %v1303, %v1301
        %v1340 = vpack.c.b16 %v1304, %v1302
        %v1341 = vpack.c.b16 %v1307, %v1305
        %v1342 = vpack.c.b16 %v1308, %v1306
        %v1343 = vpack.c.b16 %v1311, %v1309
        %v1344 = vpack.c.b16 %v1312, %v1310
        %v1345 = vpack.c.b16 %v1315, %v1313
        %v1346 = vpack.c.b16 %v1316, %v1314
        %v1347 = vpack.c.b16 %v1319, %v1317
        %v1348 = vpack.c.b16 %v1320, %v1318
        %v1349 = vpack.c.b16 %v1323, %v1321
        %v1350 = vpack.c.b16 %v1324, %v1322
        %v1351 = vpack.c.b16 %v1325, %v1325
        %v1352 = vpack.c.b16 %v1326, %v1326
        %vm1366 = vcmask 588800
        %v1368 = vsel %vm1366, %v1328, 0
        %v1371 = vsel %vm1366, %v1330, 0
        %v1374 = vsel %vm1366, %v1332, 0
        %v1377 = vsel %vm1366, %v1334, 0
        %v1380 = vsel %vm1366, %v1336, 0
        %v1383 = vsel %vm1366, %v1338, 0
        %v1386 = vsel %vm1366, %v1340, 0
        %v1389 = vsel %vm1366, %v1342, 0
        %v1392 = vsel %vm1366, %v1344, 0
        %v1395 = vsel %vm1366, %v1346, 0
        %v1398 = vsel %vm1366, %v1348, 0
        %v1401 = vsel %vm1366, %v1350, 0
        %v1404 = vsel %vm1366, %v1352, 0
        %vm1406 = vcmask 1043456
        %v1408 = vsel %vm1406, %v1225, 0
        %v1411 = vsel %vm1406, %v1226, 0
        %1413 = vmatpush.bf16.msra.mxu0 %v1215
        %1414 = vmatpush.bf16.msra.mxu0 %v1213
        %1415 = vmatpush.bf16.msra.mxu0 %v1211
        %1416 = vmatpush.bf16.msra.mxu0 %v1209
        %1417 = vmatpush.bf16.msra.mxu0 %v1207
        %1418 = vmatpush.bf16.msra.mxu0 %v1205
        %1419 = vmatpush.bf16.msra.mxu0 %v1203
        %1420 = vmatpush.bf16.msra.mxu0 %v1201
        %1421 = vmatmul.bf16.gmra.mxu0 %v1327
        %v1422 = vpop.f32.mrf.mxu0
        %v1423 = vadd.f32 0.0, %v1422
        %v1424 = vpop.f32.mrf.mxu0
        %v1425 = vadd.f32 0.0, %v1424
        %1426 = vmatmul.bf16.gmra.mxu0 %v1329
        %v1427 = vpop.f32.mrf.mxu0
        %v1428 = vadd.f32 0.0, %v1427
        %v1429 = vpop.f32.mrf.mxu0
        %v1430 = vadd.f32 0.0, %v1429
        %1431 = vmatmul.bf16.gmra.mxu0 %v1331
        %v1432 = vpop.f32.mrf.mxu0
        %v1433 = vadd.f32 0.0, %v1432
        %v1434 = vpop.f32.mrf.mxu0
        %v1435 = vadd.f32 0.0, %v1434
        %1436 = vmatmul.bf16.gmra.mxu0 %v1333
        %v1437 = vpop.f32.mrf.mxu0
        %v1438 = vadd.f32 0.0, %v1437
        %v1439 = vpop.f32.mrf.mxu0
        %v1440 = vadd.f32 0.0, %v1439
        %1441 = vmatmul.bf16.gmra.mxu0 %v1335
        %v1442 = vpop.f32.mrf.mxu0
        %v1443 = vadd.f32 0.0, %v1442
        %v1444 = vpop.f32.mrf.mxu0
        %v1445 = vadd.f32 0.0, %v1444
        %1446 = vmatmul.bf16.gmra.mxu0 %v1337
        %v1447 = vpop.f32.mrf.mxu0
        %v1448 = vadd.f32 0.0, %v1447
        %v1449 = vpop.f32.mrf.mxu0
        %v1450 = vadd.f32 0.0, %v1449
        %1451 = vmatmul.bf16.gmra.mxu0 %v1339
        %v1452 = vpop.f32.mrf.mxu0
        %v1453 = vadd.f32 0.0, %v1452
        %v1454 = vpop.f32.mrf.mxu0
        %v1455 = vadd.f32 0.0, %v1454
        %1456 = vmatmul.bf16.gmra.mxu0 %v1341
        %v1457 = vpop.f32.mrf.mxu0
        %v1458 = vadd.f32 0.0, %v1457
        %v1459 = vpop.f32.mrf.mxu0
        %v1460 = vadd.f32 0.0, %v1459
        %1461 = vmatmul.bf16.gmra.mxu0 %v1343
        %v1462 = vpop.f32.mrf.mxu0
        %v1463 = vadd.f32 0.0, %v1462
        %v1464 = vpop.f32.mrf.mxu0
        %v1465 = vadd.f32 0.0, %v1464
        %1466 = vmatmul.bf16.gmra.mxu0 %v1345
        %v1467 = vpop.f32.mrf.mxu0
        %v1468 = vadd.f32 0.0, %v1467
        %v1469 = vpop.f32.mrf.mxu0
        %v1470 = vadd.f32 0.0, %v1469
        %1471 = vmatmul.bf16.gmra.mxu0 %v1347
        %v1472 = vpop.f32.mrf.mxu0
        %v1473 = vadd.f32 0.0, %v1472
        %v1474 = vpop.f32.mrf.mxu0
        %v1475 = vadd.f32 0.0, %v1474
        %1476 = vmatmul.bf16.gmra.mxu0 %v1349
        %v1477 = vpop.f32.mrf.mxu0
        %v1478 = vadd.f32 0.0, %v1477
        %v1479 = vpop.f32.mrf.mxu0
        %v1480 = vadd.f32 0.0, %v1479
        %1481 = vmatmul.bf16.gmra.mxu0 %v1351
        %v1482 = vpop.f32.mrf.mxu0
        %v1483 = vadd.f32 0.0, %v1482
        %v1484 = vpop.f32.mrf.mxu0
        %1485 = vdwg.mxu0
        %1486 = vmatpush.bf16.msra.mxu0 0
        %1487 = vmatpush.bf16.msra.mxu0 0
        %1488 = vmatpush.bf16.msra.mxu0 0
        %1489 = vmatpush.bf16.msra.mxu0 %v1408
        %1490 = vmatpush.bf16.msra.mxu0 %v1223
        %1491 = vmatpush.bf16.msra.mxu0 %v1221
        %1492 = vmatpush.bf16.msra.mxu0 %v1219
        %1493 = vmatpush.bf16.msra.mxu0 %v1217
        %1494 = vmatmul.bf16.gmra.mxu0 %v1368
        %v1495 = vpop.f32.mrf.mxu0
        %v1496 = vadd.f32 %v1423, %v1495
        %v1497 = vpop.f32.mrf.mxu0
        %v1498 = vadd.f32 %v1425, %v1497
        %1499 = vmatmul.bf16.gmra.mxu0 %v1371
        %v1500 = vpop.f32.mrf.mxu0
        %v1501 = vadd.f32 %v1428, %v1500
        %v1502 = vpop.f32.mrf.mxu0
        %v1503 = vadd.f32 %v1430, %v1502
        %1504 = vmatmul.bf16.gmra.mxu0 %v1374
        %v1505 = vpop.f32.mrf.mxu0
        %v1506 = vadd.f32 %v1433, %v1505
        %v1507 = vpop.f32.mrf.mxu0
        %v1508 = vadd.f32 %v1435, %v1507
        %1509 = vmatmul.bf16.gmra.mxu0 %v1377
        %v1510 = vpop.f32.mrf.mxu0
        %v1511 = vadd.f32 %v1438, %v1510
        %v1512 = vpop.f32.mrf.mxu0
        %v1513 = vadd.f32 %v1440, %v1512
        %1514 = vmatmul.bf16.gmra.mxu0 %v1380
        %v1515 = vpop.f32.mrf.mxu0
        %v1516 = vadd.f32 %v1443, %v1515
        %v1517 = vpop.f32.mrf.mxu0
        %v1518 = vadd.f32 %v1445, %v1517
        %1519 = vmatmul.bf16.gmra.mxu0 %v1383
        %v1520 = vpop.f32.mrf.mxu0
        %v1521 = vadd.f32 %v1448, %v1520
        %v1522 = vpop.f32.mrf.mxu0
        %v1523 = vadd.f32 %v1450, %v1522
        %1524 = vmatmul.bf16.gmra.mxu0 %v1386
        %v1525 = vpop.f32.mrf.mxu0
        %v1526 = vadd.f32 %v1453, %v1525
        %v1527 = vpop.f32.mrf.mxu0
        %v1528 = vadd.f32 %v1455, %v1527
        %1529 = vmatmul.bf16.gmra.mxu0 %v1389
        %v1530 = vpop.f32.mrf.mxu0
        %v1531 = vadd.f32 %v1458, %v1530
        %v1532 = vpop.f32.mrf.mxu0
        %v1533 = vadd.f32 %v1460, %v1532
        %1534 = vmatmul.bf16.gmra.mxu0 %v1392
        %v1535 = vpop.f32.mrf.mxu0
        %v1536 = vadd.f32 %v1463, %v1535
        %v1537 = vpop.f32.mrf.mxu0
        %v1538 = vadd.f32 %v1465, %v1537
        %1539 = vmatmul.bf16.gmra.mxu0 %v1395
        %v1540 = vpop.f32.mrf.mxu0
        %v1541 = vadd.f32 %v1468, %v1540
        %v1542 = vpop.f32.mrf.mxu0
        %v1543 = vadd.f32 %v1470, %v1542
        %1544 = vmatmul.bf16.gmra.mxu0 %v1398
        %v1545 = vpop.f32.mrf.mxu0
        %v1546 = vadd.f32 %v1473, %v1545
        %v1547 = vpop.f32.mrf.mxu0
        %v1548 = vadd.f32 %v1475, %v1547
        %1549 = vmatmul.bf16.gmra.mxu0 %v1401
        %v1550 = vpop.f32.mrf.mxu0
        %v1551 = vadd.f32 %v1478, %v1550
        %v1552 = vpop.f32.mrf.mxu0
        %v1553 = vadd.f32 %v1480, %v1552
        %1554 = vmatmul.bf16.gmra.mxu0 %v1404
        %v1555 = vpop.f32.mrf.mxu0
        %v1556 = vadd.f32 %v1483, %v1555
        %v1557 = vpop.f32.mrf.mxu0
        %1558 = vdwg.mxu0
        %1559 = vmatpush.bf16.msra.mxu0 %v1216
        %1560 = vmatpush.bf16.msra.mxu0 %v1214
        %1561 = vmatpush.bf16.msra.mxu0 %v1212
        %1562 = vmatpush.bf16.msra.mxu0 %v1210
        %1563 = vmatpush.bf16.msra.mxu0 %v1208
        %1564 = vmatpush.bf16.msra.mxu0 %v1206
        %1565 = vmatpush.bf16.msra.mxu0 %v1204
        %1566 = vmatpush.bf16.msra.mxu0 %v1202
        %1567 = vmatmul.bf16.gmra.mxu0 %v1327
        %v1568 = vpop.f32.mrf.mxu0
        %v1569 = vadd.f32 0.0, %v1568
        %v1570 = vpop.f32.mrf.mxu0
        %v1571 = vadd.f32 0.0, %v1570
        %1572 = vmatmul.bf16.gmra.mxu0 %v1329
        %v1573 = vpop.f32.mrf.mxu0
        %v1574 = vadd.f32 0.0, %v1573
        %v1575 = vpop.f32.mrf.mxu0
        %v1576 = vadd.f32 0.0, %v1575
        %1577 = vmatmul.bf16.gmra.mxu0 %v1331
        %v1578 = vpop.f32.mrf.mxu0
        %v1579 = vadd.f32 0.0, %v1578
        %v1580 = vpop.f32.mrf.mxu0
        %v1581 = vadd.f32 0.0, %v1580
        %1582 = vmatmul.bf16.gmra.mxu0 %v1333
        %v1583 = vpop.f32.mrf.mxu0
        %v1584 = vadd.f32 0.0, %v1583
        %v1585 = vpop.f32.mrf.mxu0
        %v1586 = vadd.f32 0.0, %v1585
        %1587 = vmatmul.bf16.gmra.mxu0 %v1335
        %v1588 = vpop.f32.mrf.mxu0
        %v1589 = vadd.f32 0.0, %v1588
        %v1590 = vpop.f32.mrf.mxu0
        %v1591 = vadd.f32 0.0, %v1590
        %1592 = vmatmul.bf16.gmra.mxu0 %v1337
        %v1593 = vpop.f32.mrf.mxu0
        %v1594 = vadd.f32 0.0, %v1593
        %v1595 = vpop.f32.mrf.mxu0
        %v1596 = vadd.f32 0.0, %v1595
        %1597 = vmatmul.bf16.gmra.mxu0 %v1339
        %v1598 = vpop.f32.mrf.mxu0
        %v1599 = vadd.f32 0.0, %v1598
        %v1600 = vpop.f32.mrf.mxu0
        %v1601 = vadd.f32 0.0, %v1600
        %1602 = vmatmul.bf16.gmra.mxu0 %v1341
        %v1603 = vpop.f32.mrf.mxu0
        %v1604 = vadd.f32 0.0, %v1603
        %v1605 = vpop.f32.mrf.mxu0
        %v1606 = vadd.f32 0.0, %v1605
        %1607 = vmatmul.bf16.gmra.mxu0 %v1343
        %v1608 = vpop.f32.mrf.mxu0
        %v1609 = vadd.f32 0.0, %v1608
        %v1610 = vpop.f32.mrf.mxu0
        %v1611 = vadd.f32 0.0, %v1610
        %1612 = vmatmul.bf16.gmra.mxu0 %v1345
        %v1613 = vpop.f32.mrf.mxu0
        %v1614 = vadd.f32 0.0, %v1613
        %v1615 = vpop.f32.mrf.mxu0
        %v1616 = vadd.f32 0.0, %v1615
        %1617 = vmatmul.bf16.gmra.mxu0 %v1347
        %v1618 = vpop.f32.mrf.mxu0
        %v1619 = vadd.f32 0.0, %v1618
        %v1620 = vpop.f32.mrf.mxu0
        %v1621 = vadd.f32 0.0, %v1620
        %1622 = vmatmul.bf16.gmra.mxu0 %v1349
        %v1623 = vpop.f32.mrf.mxu0
        %v1624 = vadd.f32 0.0, %v1623
        %v1625 = vpop.f32.mrf.mxu0
        %v1626 = vadd.f32 0.0, %v1625
        %1627 = vmatmul.bf16.gmra.mxu0 %v1351
        %v1628 = vpop.f32.mrf.mxu0
        %v1629 = vadd.f32 0.0, %v1628
        %v1630 = vpop.f32.mrf.mxu0
        %1631 = vdwg.mxu0
        %1632 = vmatpush.bf16.msra.mxu0 0
        %1633 = vmatpush.bf16.msra.mxu0 0
        %1634 = vmatpush.bf16.msra.mxu0 0
        %1635 = vmatpush.bf16.msra.mxu0 %v1411
        %1636 = vmatpush.bf16.msra.mxu0 %v1224
        %1637 = vmatpush.bf16.msra.mxu0 %v1222
        %1638 = vmatpush.bf16.msra.mxu0 %v1220
        %1639 = vmatpush.bf16.msra.mxu0 %v1218
        %1640 = vmatmul.bf16.gmra.mxu0 %v1368
        %v1641 = vpop.f32.mrf.mxu0
        %v1642 = vadd.f32 %v1569, %v1641
        %v1643 = vpop.f32.mrf.mxu0
        %v1644 = vadd.f32 %v1571, %v1643
        %1645 = vmatmul.bf16.gmra.mxu0 %v1371
        %v1646 = vpop.f32.mrf.mxu0
        %v1647 = vadd.f32 %v1574, %v1646
        %v1648 = vpop.f32.mrf.mxu0
        %v1649 = vadd.f32 %v1576, %v1648
        %1650 = vmatmul.bf16.gmra.mxu0 %v1374
        %v1651 = vpop.f32.mrf.mxu0
        %v1652 = vadd.f32 %v1579, %v1651
        %v1653 = vpop.f32.mrf.mxu0
        %v1654 = vadd.f32 %v1581, %v1653
        %1655 = vmatmul.bf16.gmra.mxu0 %v1377
        %v1656 = vpop.f32.mrf.mxu0
        %v1657 = vadd.f32 %v1584, %v1656
        %v1658 = vpop.f32.mrf.mxu0
        %v1659 = vadd.f32 %v1586, %v1658
        %1660 = vmatmul.bf16.gmra.mxu0 %v1380
        %v1661 = vpop.f32.mrf.mxu0
        %v1662 = vadd.f32 %v1589, %v1661
        %v1663 = vpop.f32.mrf.mxu0
        %v1664 = vadd.f32 %v1591, %v1663
        %1665 = vmatmul.bf16.gmra.mxu0 %v1383
        %v1666 = vpop.f32.mrf.mxu0
        %v1667 = vadd.f32 %v1594, %v1666
        %v1668 = vpop.f32.mrf.mxu0
        %v1669 = vadd.f32 %v1596, %v1668
        %1670 = vmatmul.bf16.gmra.mxu0 %v1386
        %v1671 = vpop.f32.mrf.mxu0
        %v1672 = vadd.f32 %v1599, %v1671
        %v1673 = vpop.f32.mrf.mxu0
        %v1674 = vadd.f32 %v1601, %v1673
        %1675 = vmatmul.bf16.gmra.mxu0 %v1389
        %v1676 = vpop.f32.mrf.mxu0
        %v1677 = vadd.f32 %v1604, %v1676
        %v1678 = vpop.f32.mrf.mxu0
        %v1679 = vadd.f32 %v1606, %v1678
        %1680 = vmatmul.bf16.gmra.mxu0 %v1392
        %v1681 = vpop.f32.mrf.mxu0
        %v1682 = vadd.f32 %v1609, %v1681
        %v1683 = vpop.f32.mrf.mxu0
        %v1684 = vadd.f32 %v1611, %v1683
        %1685 = vmatmul.bf16.gmra.mxu0 %v1395
        %v1686 = vpop.f32.mrf.mxu0
        %v1687 = vadd.f32 %v1614, %v1686
        %v1688 = vpop.f32.mrf.mxu0
        %v1689 = vadd.f32 %v1616, %v1688
        %1690 = vmatmul.bf16.gmra.mxu0 %v1398
        %v1691 = vpop.f32.mrf.mxu0
        %v1692 = vadd.f32 %v1619, %v1691
        %v1693 = vpop.f32.mrf.mxu0
        %v1694 = vadd.f32 %v1621, %v1693
        %1695 = vmatmul.bf16.gmra.mxu0 %v1401
        %v1696 = vpop.f32.mrf.mxu0
        %v1697 = vadd.f32 %v1624, %v1696
        %v1698 = vpop.f32.mrf.mxu0
        %v1699 = vadd.f32 %v1626, %v1698
        %1700 = vmatmul.bf16.gmra.mxu0 %v1404
        %v1701 = vpop.f32.mrf.mxu0
        %v1702 = vadd.f32 %v1629, %v1701
        %v1703 = vpop.f32.mrf.mxu0
        %1704 = vdwg.mxu0
        %v1705 = vpack.c.bf16 %v1642, %v1496
        %v1706 = vpack.c.bf16 %v1644, %v1498
        %v1707 = vpack.c.bf16 %v1647, %v1501
        %v1708 = vpack.c.bf16 %v1649, %v1503
        %v1709 = vpack.c.bf16 %v1652, %v1506
        %v1710 = vpack.c.bf16 %v1654, %v1508
        %v1711 = vpack.c.bf16 %v1657, %v1511
        %v1712 = vpack.c.bf16 %v1659, %v1513
        %v1713 = vpack.c.bf16 %v1662, %v1516
        %v1714 = vpack.c.bf16 %v1664, %v1518
        %v1715 = vpack.c.bf16 %v1667, %v1521
        %v1716 = vpack.c.bf16 %v1669, %v1523
        %v1717 = vpack.c.bf16 %v1672, %v1526
        %v1718 = vpack.c.bf16 %v1674, %v1528
        %v1719 = vpack.c.bf16 %v1677, %v1531
        %v1720 = vpack.c.bf16 %v1679, %v1533
        %v1721 = vpack.c.bf16 %v1682, %v1536
        %v1722 = vpack.c.bf16 %v1684, %v1538
        %v1723 = vpack.c.bf16 %v1687, %v1541
        %v1724 = vpack.c.bf16 %v1689, %v1543
        %v1725 = vpack.c.bf16 %v1692, %v1546
        %v1726 = vpack.c.bf16 %v1694, %v1548
        %v1727 = vpack.c.bf16 %v1697, %v1551
        %v1728 = vpack.c.bf16 %v1699, %v1553
        %v1729 = vpack.c.bf16 %v1702, %v1556
        %v1730 = vld [vmem:[%s4] sm:$0xf]
        %v1731 = vld [vmem:[%s4 + $0x4] sm:$0xf]
        %v1732 = vld [vmem:[%s4 + $0x8] sm:$0xf]
        %v1733 = vld [vmem:[%s4 + $0xc] sm:$0xf]
        %v1734 = vld [vmem:[%s4 + $0x10] sm:$0xf]
        %v1735 = vld [vmem:[%s4 + $0x14] sm:$0xf]
        %v1736 = vld [vmem:[%s4 + $0x18] sm:$0xf]
        %v1737 = vld [vmem:[%s4 + $0x1c] sm:$0xf]
        %v1738 = vld [vmem:[%s4 + $0x20] sm:$0xf]
        %v1739 = vld [vmem:[%s4 + $0x24] sm:$0xf]
        %v1740 = vld [vmem:[%s4 + $0x28] sm:$0xf]
        %v1741 = vld [vmem:[%s4 + $0x2c] sm:$0xf]
        %v1742 = vld [vmem:[%s4 + $0x30] sm:$0xf]
        %v1743 = vld [vmem:[%s4 + $0x34] sm:$0xf]
        %v1744 = vld [vmem:[%s4 + $0x38] sm:$0xf]
        %v1745 = vld [vmem:[%s4 + $0x3c] sm:$0xf]
        %v1746 = vld [vmem:[%s4 + $0x40] sm:$0xf]
        %v1747 = vld [vmem:[%s4 + $0x44] sm:$0xf]
        %v1748 = vld [vmem:[%s4 + $0x48] sm:$0xf]
        %v1749 = vld [vmem:[%s4 + $0x4c] sm:$0xf]
        %v1750 = vld [vmem:[%s4 + $0x50] sm:$0xf]
        %v1751 = vld [vmem:[%s4 + $0x54] sm:$0xf]
        %v1752 = vld [vmem:[%s4 + $0x58] sm:$0xf]
        %v1753 = vld [vmem:[%s4 + $0x5c] sm:$0xf]
        %v1754 = vld [vmem:[%s4 + $0x60] sm:$0xf]
        %1756 = vset.pattern.permute.xlu0 0
        %1757 = vperm.xlu0 %1756, %v1730
        %v1758 = vpop.permute.xlu0 %1757
        %v1761 = vunpack.c.l.s4 839922192
        %v1762 = vunpack.c.0.s8 %v1761
        %v1763 = vperm.slane %v1758, %v1762
        %1765 = vset.pattern.permute.xlu0 0
        %1766 = vperm.xlu0 %1765, %v1731
        %v1767 = vpop.permute.xlu0 %1766
        %v1770 = vunpack.c.l.s4 839922192
        %v1771 = vunpack.c.0.s8 %v1770
        %v1772 = vperm.slane %v1767, %v1771
        %1774 = vset.pattern.permute.xlu0 0
        %1775 = vperm.xlu0 %1774, %v1732
        %v1776 = vpop.permute.xlu0 %1775
        %v1779 = vunpack.c.l.s4 839922192
        %v1780 = vunpack.c.0.s8 %v1779
        %v1781 = vperm.slane %v1776, %v1780
        %1783 = vset.pattern.permute.xlu0 0
        %1784 = vperm.xlu0 %1783, %v1733
        %v1785 = vpop.permute.xlu0 %1784
        %v1788 = vunpack.c.l.s4 839922192
        %v1789 = vunpack.c.0.s8 %v1788
        %v1790 = vperm.slane %v1785, %v1789
        %1792 = vset.pattern.permute.xlu0 0
        %1793 = vperm.xlu0 %1792, %v1734
        %v1794 = vpop.permute.xlu0 %1793
        %v1797 = vunpack.c.l.s4 839922192
        %v1798 = vunpack.c.0.s8 %v1797
        %v1799 = vperm.slane %v1794, %v1798
        %1801 = vset.pattern.permute.xlu0 0
        %1802 = vperm.xlu0 %1801, %v1735
        %v1803 = vpop.permute.xlu0 %1802
        %v1806 = vunpack.c.l.s4 839922192
        %v1807 = vunpack.c.0.s8 %v1806
        %v1808 = vperm.slane %v1803, %v1807
        %1810 = vset.pattern.permute.xlu0 0
        %1811 = vperm.xlu0 %1810, %v1736
        %v1812 = vpop.permute.xlu0 %1811
        %v1815 = vunpack.c.l.s4 839922192
        %v1816 = vunpack.c.0.s8 %v1815
        %v1817 = vperm.slane %v1812, %v1816
        %1819 = vset.pattern.permute.xlu0 0
        %1820 = vperm.xlu0 %1819, %v1737
        %v1821 = vpop.permute.xlu0 %1820
        %v1824 = vunpack.c.l.s4 839922192
        %v1825 = vunpack.c.0.s8 %v1824
        %v1826 = vperm.slane %v1821, %v1825
        %1828 = vset.pattern.permute.xlu0 0
        %1829 = vperm.xlu0 %1828, %v1738
        %v1830 = vpop.permute.xlu0 %1829
        %v1833 = vunpack.c.l.s4 839922192
        %v1834 = vunpack.c.0.s8 %v1833
        %v1835 = vperm.slane %v1830, %v1834
        %1837 = vset.pattern.permute.xlu0 0
        %1838 = vperm.xlu0 %1837, %v1739
        %v1839 = vpop.permute.xlu0 %1838
        %v1842 = vunpack.c.l.s4 839922192
        %v1843 = vunpack.c.0.s8 %v1842
        %v1844 = vperm.slane %v1839, %v1843
        %1846 = vset.pattern.permute.xlu0 0
        %1847 = vperm.xlu0 %1846, %v1740
        %v1848 = vpop.permute.xlu0 %1847
        %v1851 = vunpack.c.l.s4 839922192
        %v1852 = vunpack.c.0.s8 %v1851
        %v1853 = vperm.slane %v1848, %v1852
        %1855 = vset.pattern.permute.xlu0 0
        %1856 = vperm.xlu0 %1855, %v1741
        %v1857 = vpop.permute.xlu0 %1856
        %v1860 = vunpack.c.l.s4 839922192
        %v1861 = vunpack.c.0.s8 %v1860
        %v1862 = vperm.slane %v1857, %v1861
        %1864 = vset.pattern.permute.xlu0 0
        %1865 = vperm.xlu0 %1864, %v1742
        %v1866 = vpop.permute.xlu0 %1865
        %v1869 = vunpack.c.l.s4 839922192
        %v1870 = vunpack.c.0.s8 %v1869
        %v1871 = vperm.slane %v1866, %v1870
        %1873 = vset.pattern.permute.xlu0 0
        %1874 = vperm.xlu0 %1873, %v1743
        %v1875 = vpop.permute.xlu0 %1874
        %v1878 = vunpack.c.l.s4 839922192
        %v1879 = vunpack.c.0.s8 %v1878
        %v1880 = vperm.slane %v1875, %v1879
        %1882 = vset.pattern.permute.xlu0 0
        %1883 = vperm.xlu0 %1882, %v1744
        %v1884 = vpop.permute.xlu0 %1883
        %v1887 = vunpack.c.l.s4 839922192
        %v1888 = vunpack.c.0.s8 %v1887
        %v1889 = vperm.slane %v1884, %v1888
        %1891 = vset.pattern.permute.xlu0 0
        %1892 = vperm.xlu0 %1891, %v1745
        %v1893 = vpop.permute.xlu0 %1892
        %v1896 = vunpack.c.l.s4 839922192
        %v1897 = vunpack.c.0.s8 %v1896
        %v1898 = vperm.slane %v1893, %v1897
        %1900 = vset.pattern.permute.xlu0 0
        %1901 = vperm.xlu0 %1900, %v1746
        %v1902 = vpop.permute.xlu0 %1901
        %v1905 = vunpack.c.l.s4 839922192
        %v1906 = vunpack.c.0.s8 %v1905
        %v1907 = vperm.slane %v1902, %v1906
        %1909 = vset.pattern.permute.xlu0 0
        %1910 = vperm.xlu0 %1909, %v1747
        %v1911 = vpop.permute.xlu0 %1910
        %v1914 = vunpack.c.l.s4 839922192
        %v1915 = vunpack.c.0.s8 %v1914
        %v1916 = vperm.slane %v1911, %v1915
        %1918 = vset.pattern.permute.xlu0 0
        %1919 = vperm.xlu0 %1918, %v1748
        %v1920 = vpop.permute.xlu0 %1919
        %v1923 = vunpack.c.l.s4 839922192
        %v1924 = vunpack.c.0.s8 %v1923
        %v1925 = vperm.slane %v1920, %v1924
        %1927 = vset.pattern.permute.xlu0 0
        %1928 = vperm.xlu0 %1927, %v1749
        %v1929 = vpop.permute.xlu0 %1928
        %v1932 = vunpack.c.l.s4 839922192
        %v1933 = vunpack.c.0.s8 %v1932
        %v1934 = vperm.slane %v1929, %v1933
        %1936 = vset.pattern.permute.xlu0 0
        %1937 = vperm.xlu0 %1936, %v1750
        %v1938 = vpop.permute.xlu0 %1937
        %v1941 = vunpack.c.l.s4 839922192
        %v1942 = vunpack.c.0.s8 %v1941
        %v1943 = vperm.slane %v1938, %v1942
        %1945 = vset.pattern.permute.xlu0 0
        %1946 = vperm.xlu0 %1945, %v1751
        %v1947 = vpop.permute.xlu0 %1946
        %v1950 = vunpack.c.l.s4 839922192
        %v1951 = vunpack.c.0.s8 %v1950
        %v1952 = vperm.slane %v1947, %v1951
        %1954 = vset.pattern.permute.xlu0 0
        %1955 = vperm.xlu0 %1954, %v1752
        %v1956 = vpop.permute.xlu0 %1955
        %v1959 = vunpack.c.l.s4 839922192
        %v1960 = vunpack.c.0.s8 %v1959
        %v1961 = vperm.slane %v1956, %v1960
        %1963 = vset.pattern.permute.xlu0 0
        %1964 = vperm.xlu0 %1963, %v1753
        %v1965 = vpop.permute.xlu0 %1964
        %v1968 = vunpack.c.l.s4 839922192
        %v1969 = vunpack.c.0.s8 %v1968
        %v1970 = vperm.slane %v1965, %v1969
        %1972 = vset.pattern.permute.xlu0 0
        %1973 = vperm.xlu0 %1972, %v1754
        %v1974 = vpop.permute.xlu0 %1973
        %v1977 = vunpack.c.l.s4 839922192
        %v1978 = vunpack.c.0.s8 %v1977
        %v1979 = vperm.slane %v1974, %v1978
        %v1980 = vunpack.c.l.bf16 %v1705
        %v1981 = vunpack.c.h.bf16 %v1705
        %v1982 = vunpack.c.l.bf16 %v1706
        %v1983 = vunpack.c.h.bf16 %v1706
        %v1984 = vunpack.c.l.bf16 %v1707
        %v1985 = vunpack.c.h.bf16 %v1707
        %v1986 = vunpack.c.l.bf16 %v1708
        %v1987 = vunpack.c.h.bf16 %v1708
        %v1988 = vunpack.c.l.bf16 %v1709
        %v1989 = vunpack.c.h.bf16 %v1709
        %v1990 = vunpack.c.l.bf16 %v1710
        %v1991 = vunpack.c.h.bf16 %v1710
        %v1992 = vunpack.c.l.bf16 %v1711
        %v1993 = vunpack.c.h.bf16 %v1711
        %v1994 = vunpack.c.l.bf16 %v1712
        %v1995 = vunpack.c.h.bf16 %v1712
        %v1996 = vunpack.c.l.bf16 %v1713
        %v1997 = vunpack.c.h.bf16 %v1713
        %v1998 = vunpack.c.l.bf16 %v1714
        %v1999 = vunpack.c.h.bf16 %v1714
        %v2000 = vunpack.c.l.bf16 %v1715
        %v2001 = vunpack.c.h.bf16 %v1715
        %v2002 = vunpack.c.l.bf16 %v1716
        %v2003 = vunpack.c.h.bf16 %v1716
        %v2004 = vunpack.c.l.bf16 %v1717
        %v2005 = vunpack.c.h.bf16 %v1717
        %v2006 = vunpack.c.l.bf16 %v1718
        %v2007 = vunpack.c.h.bf16 %v1718
        %v2008 = vunpack.c.l.bf16 %v1719
        %v2009 = vunpack.c.h.bf16 %v1719
        %v2010 = vunpack.c.l.bf16 %v1720
        %v2011 = vunpack.c.h.bf16 %v1720
        %v2012 = vunpack.c.l.bf16 %v1721
        %v2013 = vunpack.c.h.bf16 %v1721
        %v2014 = vunpack.c.l.bf16 %v1722
        %v2015 = vunpack.c.h.bf16 %v1722
        %v2016 = vunpack.c.l.bf16 %v1723
        %v2017 = vunpack.c.h.bf16 %v1723
        %v2018 = vunpack.c.l.bf16 %v1724
        %v2019 = vunpack.c.h.bf16 %v1724
        %v2020 = vunpack.c.l.bf16 %v1725
        %v2021 = vunpack.c.h.bf16 %v1725
        %v2022 = vunpack.c.l.bf16 %v1726
        %v2023 = vunpack.c.h.bf16 %v1726
        %v2024 = vunpack.c.l.bf16 %v1727
        %v2025 = vunpack.c.h.bf16 %v1727
        %v2026 = vunpack.c.l.bf16 %v1728
        %v2027 = vunpack.c.h.bf16 %v1728
        %v2028 = vunpack.c.l.bf16 %v1729
        %v2029 = vunpack.c.h.bf16 %v1729
        %v2030 = vunpack.c.l.bf16 %v1763
        %v2031 = vunpack.c.l.bf16 %v1772
        %v2032 = vunpack.c.l.bf16 %v1781
        %v2033 = vunpack.c.l.bf16 %v1790
        %v2034 = vunpack.c.l.bf16 %v1799
        %v2035 = vunpack.c.l.bf16 %v1808
        %v2036 = vunpack.c.l.bf16 %v1817
        %v2037 = vunpack.c.l.bf16 %v1826
        %v2038 = vunpack.c.l.bf16 %v1835
        %v2039 = vunpack.c.l.bf16 %v1844
        %v2040 = vunpack.c.l.bf16 %v1853
        %v2041 = vunpack.c.l.bf16 %v1862
        %v2042 = vunpack.c.l.bf16 %v1871
        %v2043 = vunpack.c.l.bf16 %v1880
        %v2044 = vunpack.c.l.bf16 %v1889
        %v2045 = vunpack.c.l.bf16 %v1898
        %v2046 = vunpack.c.l.bf16 %v1907
        %v2047 = vunpack.c.l.bf16 %v1916
        %v2048 = vunpack.c.l.bf16 %v1925
        %v2049 = vunpack.c.l.bf16 %v1934
        %v2050 = vunpack.c.l.bf16 %v1943
        %v2051 = vunpack.c.l.bf16 %v1952
        %v2052 = vunpack.c.l.bf16 %v1961
        %v2053 = vunpack.c.l.bf16 %v1970
        %v2054 = vunpack.c.l.bf16 %v1979
        %v2055 = vadd.f32 %v1980, %v2030
        %v2056 = vadd.f32 %v1981, %v2030
        %v2057 = vadd.f32 %v1982, %v2031
        %v2058 = vadd.f32 %v1983, %v2031
        %v2059 = vadd.f32 %v1984, %v2032
        %v2060 = vadd.f32 %v1985, %v2032
        %v2061 = vadd.f32 %v1986, %v2033
        %v2062 = vadd.f32 %v1987, %v2033
        %v2063 = vadd.f32 %v1988, %v2034
        %v2064 = vadd.f32 %v1989, %v2034
        %v2065 = vadd.f32 %v1990, %v2035
        %v2066 = vadd.f32 %v1991, %v2035
        %v2067 = vadd.f32 %v1992, %v2036
        %v2068 = vadd.f32 %v1993, %v2036
        %v2069 = vadd.f32 %v1994, %v2037
        %v2070 = vadd.f32 %v1995, %v2037
        %v2071 = vadd.f32 %v1996, %v2038
        %v2072 = vadd.f32 %v1997, %v2038
        %v2073 = vadd.f32 %v1998, %v2039
        %v2074 = vadd.f32 %v1999, %v2039
        %v2075 = vadd.f32 %v2000, %v2040
        %v2076 = vadd.f32 %v2001, %v2040
        %v2077 = vadd.f32 %v2002, %v2041
        %v2078 = vadd.f32 %v2003, %v2041
        %v2079 = vadd.f32 %v2004, %v2042
        %v2080 = vadd.f32 %v2005, %v2042
        %v2081 = vadd.f32 %v2006, %v2043
        %v2082 = vadd.f32 %v2007, %v2043
        %v2083 = vadd.f32 %v2008, %v2044
        %v2084 = vadd.f32 %v2009, %v2044
        %v2085 = vadd.f32 %v2010, %v2045
        %v2086 = vadd.f32 %v2011, %v2045
        %v2087 = vadd.f32 %v2012, %v2046
        %v2088 = vadd.f32 %v2013, %v2046
        %v2089 = vadd.f32 %v2014, %v2047
        %v2090 = vadd.f32 %v2015, %v2047
        %v2091 = vadd.f32 %v2016, %v2048
        %v2092 = vadd.f32 %v2017, %v2048
        %v2093 = vadd.f32 %v2018, %v2049
        %v2094 = vadd.f32 %v2019, %v2049
        %v2095 = vadd.f32 %v2020, %v2050
        %v2096 = vadd.f32 %v2021, %v2050
        %v2097 = vadd.f32 %v2022, %v2051
        %v2098 = vadd.f32 %v2023, %v2051
        %v2099 = vadd.f32 %v2024, %v2052
        %v2100 = vadd.f32 %v2025, %v2052
        %v2101 = vadd.f32 %v2026, %v2053
        %v2102 = vadd.f32 %v2027, %v2053
        %v2103 = vadd.f32 %v2028, %v2054
        %v2104 = vadd.f32 %v2029, %v2054
        %v2105 = vpack.c.bf16 %v2056, %v2055
        %v2106 = vpack.c.bf16 %v2058, %v2057
        %v2107 = vpack.c.bf16 %v2060, %v2059
        %v2108 = vpack.c.bf16 %v2062, %v2061
        %v2109 = vpack.c.bf16 %v2064, %v2063
        %v2110 = vpack.c.bf16 %v2066, %v2065
        %v2111 = vpack.c.bf16 %v2068, %v2067
        %v2112 = vpack.c.bf16 %v2070, %v2069
        %v2113 = vpack.c.bf16 %v2072, %v2071
        %v2114 = vpack.c.bf16 %v2074, %v2073
        %v2115 = vpack.c.bf16 %v2076, %v2075
        %v2116 = vpack.c.bf16 %v2078, %v2077
        %v2117 = vpack.c.bf16 %v2080, %v2079
        %v2118 = vpack.c.bf16 %v2082, %v2081
        %v2119 = vpack.c.bf16 %v2084, %v2083
        %v2120 = vpack.c.bf16 %v2086, %v2085
        %v2121 = vpack.c.bf16 %v2088, %v2087
        %v2122 = vpack.c.bf16 %v2090, %v2089
        %v2123 = vpack.c.bf16 %v2092, %v2091
        %v2124 = vpack.c.bf16 %v2094, %v2093
        %v2125 = vpack.c.bf16 %v2096, %v2095
        %v2126 = vpack.c.bf16 %v2098, %v2097
        %v2127 = vpack.c.bf16 %v2100, %v2099
        %v2128 = vpack.c.bf16 %v2102, %v2101
        %v2129 = vpack.c.bf16 %v2104, %v2103
        %v2130 = vunpack.c.l.bf16 %v2105
        %v2131 = vunpack.c.h.bf16 %v2105
        %v2132 = vunpack.c.l.bf16 %v2106
        %v2133 = vunpack.c.h.bf16 %v2106
        %v2134 = vunpack.c.l.bf16 %v2107
        %v2135 = vunpack.c.h.bf16 %v2107
        %v2136 = vunpack.c.l.bf16 %v2108
        %v2137 = vunpack.c.h.bf16 %v2108
        %v2138 = vunpack.c.l.bf16 %v2109
        %v2139 = vunpack.c.h.bf16 %v2109
        %v2140 = vunpack.c.l.bf16 %v2110
        %v2141 = vunpack.c.h.bf16 %v2110
        %v2142 = vunpack.c.l.bf16 %v2111
        %v2143 = vunpack.c.h.bf16 %v2111
        %v2144 = vunpack.c.l.bf16 %v2112
        %v2145 = vunpack.c.h.bf16 %v2112
        %v2146 = vunpack.c.l.bf16 %v2113
        %v2147 = vunpack.c.h.bf16 %v2113
        %v2148 = vunpack.c.l.bf16 %v2114
        %v2149 = vunpack.c.h.bf16 %v2114
        %v2150 = vunpack.c.l.bf16 %v2115
        %v2151 = vunpack.c.h.bf16 %v2115
        %v2152 = vunpack.c.l.bf16 %v2116
        %v2153 = vunpack.c.h.bf16 %v2116
        %v2154 = vunpack.c.l.bf16 %v2117
        %v2155 = vunpack.c.h.bf16 %v2117
        %v2156 = vunpack.c.l.bf16 %v2118
        %v2157 = vunpack.c.h.bf16 %v2118
        %v2158 = vunpack.c.l.bf16 %v2119
        %v2159 = vunpack.c.h.bf16 %v2119
        %v2160 = vunpack.c.l.bf16 %v2120
        %v2161 = vunpack.c.h.bf16 %v2120
        %v2162 = vunpack.c.l.bf16 %v2121
        %v2163 = vunpack.c.h.bf16 %v2121
        %v2164 = vunpack.c.l.bf16 %v2122
        %v2165 = vunpack.c.h.bf16 %v2122
        %v2166 = vunpack.c.l.bf16 %v2123
        %v2167 = vunpack.c.h.bf16 %v2123
        %v2168 = vunpack.c.l.bf16 %v2124
        %v2169 = vunpack.c.h.bf16 %v2124
        %v2170 = vunpack.c.l.bf16 %v2125
        %v2171 = vunpack.c.h.bf16 %v2125
        %v2172 = vunpack.c.l.bf16 %v2126
        %v2173 = vunpack.c.h.bf16 %v2126
        %v2174 = vunpack.c.l.bf16 %v2127
        %v2175 = vunpack.c.h.bf16 %v2127
        %v2176 = vunpack.c.l.bf16 %v2128
        %v2177 = vunpack.c.h.bf16 %v2128
        %v2178 = vunpack.c.l.bf16 %v2129
        %v2179 = vunpack.c.h.bf16 %v2129
        %v2180 = vmax.f32 %v2130, 0.0
        %v2181 = vmax.f32 %v2131, 0.0
        %v2182 = vmax.f32 %v2132, 0.0
        %v2183 = vmax.f32 %v2133, 0.0
        %v2184 = vmax.f32 %v2134, 0.0
        %v2185 = vmax.f32 %v2135, 0.0
        %v2186 = vmax.f32 %v2136, 0.0
        %v2187 = vmax.f32 %v2137, 0.0
        %v2188 = vmax.f32 %v2138, 0.0
        %v2189 = vmax.f32 %v2139, 0.0
        %v2190 = vmax.f32 %v2140, 0.0
        %v2191 = vmax.f32 %v2141, 0.0
        %v2192 = vmax.f32 %v2142, 0.0
        %v2193 = vmax.f32 %v2143, 0.0
        %v2194 = vmax.f32 %v2144, 0.0
        %v2195 = vmax.f32 %v2145, 0.0
        %v2196 = vmax.f32 %v2146, 0.0
        %v2197 = vmax.f32 %v2147, 0.0
        %v2198 = vmax.f32 %v2148, 0.0
        %v2199 = vmax.f32 %v2149, 0.0
        %v2200 = vmax.f32 %v2150, 0.0
        %v2201 = vmax.f32 %v2151, 0.0
        %v2202 = vmax.f32 %v2152, 0.0
        %v2203 = vmax.f32 %v2153, 0.0
        %v2204 = vmax.f32 %v2154, 0.0
        %v2205 = vmax.f32 %v2155, 0.0
        %v2206 = vmax.f32 %v2156, 0.0
        %v2207 = vmax.f32 %v2157, 0.0
        %v2208 = vmax.f32 %v2158, 0.0
        %v2209 = vmax.f32 %v2159, 0.0
        %v2210 = vmax.f32 %v2160, 0.0
        %v2211 = vmax.f32 %v2161, 0.0
        %v2212 = vmax.f32 %v2162, 0.0
        %v2213 = vmax.f32 %v2163, 0.0
        %v2214 = vmax.f32 %v2164, 0.0
        %v2215 = vmax.f32 %v2165, 0.0
        %v2216 = vmax.f32 %v2166, 0.0
        %v2217 = vmax.f32 %v2167, 0.0
        %v2218 = vmax.f32 %v2168, 0.0
        %v2219 = vmax.f32 %v2169, 0.0
        %v2220 = vmax.f32 %v2170, 0.0
        %v2221 = vmax.f32 %v2171, 0.0
        %v2222 = vmax.f32 %v2172, 0.0
        %v2223 = vmax.f32 %v2173, 0.0
        %v2224 = vmax.f32 %v2174, 0.0
        %v2225 = vmax.f32 %v2175, 0.0
        %v2226 = vmax.f32 %v2176, 0.0
        %v2227 = vmax.f32 %v2177, 0.0
        %v2228 = vmax.f32 %v2178, 0.0
        %v2229 = vmax.f32 %v2179, 0.0
        %v2230 = vpack.c.bf16 %v2181, %v2180
        %v2231 = vpack.c.bf16 %v2183, %v2182
        %v2232 = vpack.c.bf16 %v2185, %v2184
        %v2233 = vpack.c.bf16 %v2187, %v2186
        %v2234 = vpack.c.bf16 %v2189, %v2188
        %v2235 = vpack.c.bf16 %v2191, %v2190
        %v2236 = vpack.c.bf16 %v2193, %v2192
        %v2237 = vpack.c.bf16 %v2195, %v2194
        %v2238 = vpack.c.bf16 %v2197, %v2196
        %v2239 = vpack.c.bf16 %v2199, %v2198
        %v2240 = vpack.c.bf16 %v2201, %v2200
        %v2241 = vpack.c.bf16 %v2203, %v2202
        %v2242 = vpack.c.bf16 %v2205, %v2204
        %v2243 = vpack.c.bf16 %v2207, %v2206
        %v2244 = vpack.c.bf16 %v2209, %v2208
        %v2245 = vpack.c.bf16 %v2211, %v2210
        %v2246 = vpack.c.bf16 %v2213, %v2212
        %v2247 = vpack.c.bf16 %v2215, %v2214
        %v2248 = vpack.c.bf16 %v2217, %v2216
        %v2249 = vpack.c.bf16 %v2219, %v2218
        %v2250 = vpack.c.bf16 %v2221, %v2220
        %v2251 = vpack.c.bf16 %v2223, %v2222
        %v2252 = vpack.c.bf16 %v2225, %v2224
        %v2253 = vpack.c.bf16 %v2227, %v2226
        %v2254 = vpack.c.bf16 %v2229, %v2228
        %v2255 = vunpack.c.l.bf16 %v2230
        %v2256 = vunpack.c.h.bf16 %v2230
        %v2257 = vunpack.c.l.bf16 %v2231
        %v2258 = vunpack.c.h.bf16 %v2231
        %v2259 = vunpack.c.l.bf16 %v2232
        %v2260 = vunpack.c.h.bf16 %v2232
        %v2261 = vunpack.c.l.bf16 %v2233
        %v2262 = vunpack.c.h.bf16 %v2233
        %v2263 = vunpack.c.l.bf16 %v2234
        %v2264 = vunpack.c.h.bf16 %v2234
        %v2265 = vunpack.c.l.bf16 %v2235
        %v2266 = vunpack.c.h.bf16 %v2235
        %v2267 = vunpack.c.l.bf16 %v2236
        %v2268 = vunpack.c.h.bf16 %v2236
        %v2269 = vunpack.c.l.bf16 %v2237
        %v2270 = vunpack.c.h.bf16 %v2237
        %v2271 = vunpack.c.l.bf16 %v2238
        %v2272 = vunpack.c.h.bf16 %v2238
        %v2273 = vunpack.c.l.bf16 %v2239
        %v2274 = vunpack.c.h.bf16 %v2239
        %v2275 = vunpack.c.l.bf16 %v2240
        %v2276 = vunpack.c.h.bf16 %v2240
        %v2277 = vunpack.c.l.bf16 %v2241
        %v2278 = vunpack.c.h.bf16 %v2241
        %v2279 = vunpack.c.l.bf16 %v2242
        %v2280 = vunpack.c.h.bf16 %v2242
        %v2281 = vunpack.c.l.bf16 %v2243
        %v2282 = vunpack.c.h.bf16 %v2243
        %v2283 = vunpack.c.l.bf16 %v2244
        %v2284 = vunpack.c.h.bf16 %v2244
        %v2285 = vunpack.c.l.bf16 %v2245
        %v2286 = vunpack.c.h.bf16 %v2245
        %v2287 = vunpack.c.l.bf16 %v2246
        %v2288 = vunpack.c.h.bf16 %v2246
        %v2289 = vunpack.c.l.bf16 %v2247
        %v2290 = vunpack.c.h.bf16 %v2247
        %v2291 = vunpack.c.l.bf16 %v2248
        %v2292 = vunpack.c.h.bf16 %v2248
        %v2293 = vunpack.c.l.bf16 %v2249
        %v2294 = vunpack.c.h.bf16 %v2249
        %v2295 = vunpack.c.l.bf16 %v2250
        %v2296 = vunpack.c.h.bf16 %v2250
        %v2297 = vunpack.c.l.bf16 %v2251
        %v2298 = vunpack.c.h.bf16 %v2251
        %v2299 = vunpack.c.l.bf16 %v2252
        %v2300 = vunpack.c.h.bf16 %v2252
        %v2301 = vunpack.c.l.bf16 %v2253
        %v2302 = vunpack.c.h.bf16 %v2253
        %v2303 = vunpack.c.l.bf16 %v2254
        %v2304 = vunpack.c.h.bf16 %v2254
        %v2305 = vld [vmem:[%s5] sm:$0xff]
        %v2306 = vld [vmem:[%s5 + $0x8] sm:$0xff]
        %v2307 = vld [vmem:[%s5 + $0x10] sm:$0xff]
        %v2308 = vld [vmem:[%s5 + $0x18] sm:$0xff]
        %v2309 = vld [vmem:[%s5 + $0x20] sm:$0xff]
        %v2310 = vld [vmem:[%s5 + $0x28] sm:$0xff]
        %v2311 = vld [vmem:[%s5 + $0x30] sm:$0xff]
        %v2312 = vld [vmem:[%s5 + $0x38] sm:$0xff]
        %v2313 = vld [vmem:[%s5 + $0x40] sm:$0xff]
        %v2314 = vld [vmem:[%s5 + $0x48] sm:$0xff]
        %v2315 = vld [vmem:[%s5 + $0x50] sm:$0xff]
        %v2316 = vld [vmem:[%s5 + $0x58] sm:$0xff]
        %v2317 = vld [vmem:[%s5 + $0x60] sm:$0xff]
        %v2318 = vld [vmem:[%s5 + $0x68] sm:$0xff]
        %v2319 = vld [vmem:[%s5 + $0x70] sm:$0xff]
        %v2320 = vld [vmem:[%s5 + $0x78] sm:$0xff]
        %v2321 = vld [vmem:[%s5 + $0x80] sm:$0xff]
        %v2322 = vld [vmem:[%s5 + $0x88] sm:$0xff]
        %v2323 = vld [vmem:[%s5 + $0x90] sm:$0xff]
        %v2324 = vld [vmem:[%s5 + $0x98] sm:$0xff]
        %v2325 = vld [vmem:[%s5 + $0xa0] sm:$0xff]
        %v2326 = vld [vmem:[%s5 + $0xa8] sm:$0xff]
        %v2327 = vld [vmem:[%s5 + $0xb0] sm:$0xff]
        %v2328 = vld [vmem:[%s5 + $0xb8] sm:$0xff]
        %v2329 = vld [vmem:[%s5 + $0xc0] sm:$0xff]
        %2331 = vset.pattern.permute.xlu0 0
        %2332 = vperm.xlu0 %2331, %v2305
        %v2333 = vpop.permute.xlu0 %2332
        %2336 = vset.pattern.permute.xlu0 0
        %2337 = vperm.xlu0 %2336, %v2306
        %v2338 = vpop.permute.xlu0 %2337
        %2341 = vset.pattern.permute.xlu0 0
        %2342 = vperm.xlu0 %2341, %v2307
        %v2343 = vpop.permute.xlu0 %2342
        %2346 = vset.pattern.permute.xlu0 0
        %2347 = vperm.xlu0 %2346, %v2308
        %v2348 = vpop.permute.xlu0 %2347
        %2351 = vset.pattern.permute.xlu0 0
        %2352 = vperm.xlu0 %2351, %v2309
        %v2353 = vpop.permute.xlu0 %2352
        %2356 = vset.pattern.permute.xlu0 0
        %2357 = vperm.xlu0 %2356, %v2310
        %v2358 = vpop.permute.xlu0 %2357
        %2361 = vset.pattern.permute.xlu0 0
        %2362 = vperm.xlu0 %2361, %v2311
        %v2363 = vpop.permute.xlu0 %2362
        %2366 = vset.pattern.permute.xlu0 0
        %2367 = vperm.xlu0 %2366, %v2312
        %v2368 = vpop.permute.xlu0 %2367
        %2371 = vset.pattern.permute.xlu0 0
        %2372 = vperm.xlu0 %2371, %v2313
        %v2373 = vpop.permute.xlu0 %2372
        %2376 = vset.pattern.permute.xlu0 0
        %2377 = vperm.xlu0 %2376, %v2314
        %v2378 = vpop.permute.xlu0 %2377
        %2381 = vset.pattern.permute.xlu0 0
        %2382 = vperm.xlu0 %2381, %v2315
        %v2383 = vpop.permute.xlu0 %2382
        %2386 = vset.pattern.permute.xlu0 0
        %2387 = vperm.xlu0 %2386, %v2316
        %v2388 = vpop.permute.xlu0 %2387
        %2391 = vset.pattern.permute.xlu0 0
        %2392 = vperm.xlu0 %2391, %v2317
        %v2393 = vpop.permute.xlu0 %2392
        %2396 = vset.pattern.permute.xlu0 0
        %2397 = vperm.xlu0 %2396, %v2318
        %v2398 = vpop.permute.xlu0 %2397
        %2401 = vset.pattern.permute.xlu0 0
        %2402 = vperm.xlu0 %2401, %v2319
        %v2403 = vpop.permute.xlu0 %2402
        %2406 = vset.pattern.permute.xlu0 0
        %2407 = vperm.xlu0 %2406, %v2320
        %v2408 = vpop.permute.xlu0 %2407
        %2411 = vset.pattern.permute.xlu0 0
        %2412 = vperm.xlu0 %2411, %v2321
        %v2413 = vpop.permute.xlu0 %2412
        %2416 = vset.pattern.permute.xlu0 0
        %2417 = vperm.xlu0 %2416, %v2322
        %v2418 = vpop.permute.xlu0 %2417
        %2421 = vset.pattern.permute.xlu0 0
        %2422 = vperm.xlu0 %2421, %v2323
        %v2423 = vpop.permute.xlu0 %2422
        %2426 = vset.pattern.permute.xlu0 0
        %2427 = vperm.xlu0 %2426, %v2324
        %v2428 = vpop.permute.xlu0 %2427
        %2431 = vset.pattern.permute.xlu0 0
        %2432 = vperm.xlu0 %2431, %v2325
        %v2433 = vpop.permute.xlu0 %2432
        %2436 = vset.pattern.permute.xlu0 0
        %2437 = vperm.xlu0 %2436, %v2326
        %v2438 = vpop.permute.xlu0 %2437
        %2441 = vset.pattern.permute.xlu0 0
        %2442 = vperm.xlu0 %2441, %v2327
        %v2443 = vpop.permute.xlu0 %2442
        %2446 = vset.pattern.permute.xlu0 0
        %2447 = vperm.xlu0 %2446, %v2328
        %v2448 = vpop.permute.xlu0 %2447
        %2451 = vset.pattern.permute.xlu0 0
        %2452 = vperm.xlu0 %2451, %v2329
        %v2453 = vpop.permute.xlu0 %2452
        %v2455 = vmul.f32 %v2255, %v2333
        %v2456 = vmul.f32 %v2256, %v2333
        %v2457 = vmul.f32 %v2257, %v2338
        %v2458 = vmul.f32 %v2258, %v2338
        %v2459 = vmul.f32 %v2259, %v2343
        %v2460 = vmul.f32 %v2260, %v2343
        %v2461 = vmul.f32 %v2261, %v2348
        %v2462 = vmul.f32 %v2262, %v2348
        %v2463 = vmul.f32 %v2263, %v2353
        %v2464 = vmul.f32 %v2264, %v2353
        %v2465 = vmul.f32 %v2265, %v2358
        %v2466 = vmul.f32 %v2266, %v2358
        %v2467 = vmul.f32 %v2267, %v2363
        %v2468 = vmul.f32 %v2268, %v2363
        %v2469 = vmul.f32 %v2269, %v2368
        %v2470 = vmul.f32 %v2270, %v2368
        %v2471 = vmul.f32 %v2271, %v2373
        %v2472 = vmul.f32 %v2272, %v2373
        %v2473 = vmul.f32 %v2273, %v2378
        %v2474 = vmul.f32 %v2274, %v2378
        %v2475 = vmul.f32 %v2275, %v2383
        %v2476 = vmul.f32 %v2276, %v2383
        %v2477 = vmul.f32 %v2277, %v2388
        %v2478 = vmul.f32 %v2278, %v2388
        %v2479 = vmul.f32 %v2279, %v2393
        %v2480 = vmul.f32 %v2280, %v2393
        %v2481 = vmul.f32 %v2281, %v2398
        %v2482 = vmul.f32 %v2282, %v2398
        %v2483 = vmul.f32 %v2283, %v2403
        %v2484 = vmul.f32 %v2284, %v2403
        %v2485 = vmul.f32 %v2285, %v2408
        %v2486 = vmul.f32 %v2286, %v2408
        %v2487 = vmul.f32 %v2287, %v2413
        %v2488 = vmul.f32 %v2288, %v2413
        %v2489 = vmul.f32 %v2289, %v2418
        %v2490 = vmul.f32 %v2290, %v2418
        %v2491 = vmul.f32 %v2291, %v2423
        %v2492 = vmul.f32 %v2292, %v2423
        %v2493 = vmul.f32 %v2293, %v2428
        %v2494 = vmul.f32 %v2294, %v2428
        %v2495 = vmul.f32 %v2295, %v2433
        %v2496 = vmul.f32 %v2296, %v2433
        %v2497 = vmul.f32 %v2297, %v2438
        %v2498 = vmul.f32 %v2298, %v2438
        %v2499 = vmul.f32 %v2299, %v2443
        %v2500 = vmul.f32 %v2300, %v2443
        %v2501 = vmul.f32 %v2301, %v2448
        %v2502 = vmul.f32 %v2302, %v2448
        %v2503 = vmul.f32 %v2303, %v2453
        %v2504 = vmul.f32 %v2304, %v2453
        %v2505 = vadd.f32 %v2455, %v2457
        %v2506 = vadd.f32 %v2505, %v2459
        %v2507 = vadd.f32 %v2506, %v2461
        %v2508 = vadd.f32 %v2507, %v2463
        %v2509 = vadd.f32 %v2508, %v2465
        %v2510 = vadd.f32 %v2509, %v2467
        %v2511 = vadd.f32 %v2510, %v2469
        %v2512 = vadd.f32 %v2511, %v2471
        %v2513 = vadd.f32 %v2512, %v2473
        %v2514 = vadd.f32 %v2513, %v2475
        %v2515 = vadd.f32 %v2514, %v2477
        %v2516 = vadd.f32 %v2515, %v2479
        %v2517 = vadd.f32 %v2516, %v2481
        %v2518 = vadd.f32 %v2517, %v2483
        %v2519 = vadd.f32 %v2518, %v2485
        %v2520 = vadd.f32 %v2519, %v2487
        %v2521 = vadd.f32 %v2520, %v2489
        %v2522 = vadd.f32 %v2521, %v2491
        %v2523 = vadd.f32 %v2522, %v2493
        %v2524 = vadd.f32 %v2523, %v2495
        %v2525 = vadd.f32 %v2524, %v2497
        %v2526 = vadd.f32 %v2525, %v2499
        %v2527 = vadd.f32 %v2526, %v2501
        %v2528 = vadd.f32 %v2527, %v2503
        %v2529 = vrot.slane %v2528, 4
        %v2530 = vadd.f32 %v2528, %v2529
        %v2531 = vrot.slane %v2530, 2
        %v2532 = vadd.f32 %v2530, %v2531
        %v2533 = vrot.slane %v2532, 1
        %v2534 = vadd.f32 %v2532, %v2533
        %v2535 = vadd.f32 %v2456, %v2458
        %v2536 = vadd.f32 %v2535, %v2460
        %v2537 = vadd.f32 %v2536, %v2462
        %v2538 = vadd.f32 %v2537, %v2464
        %v2539 = vadd.f32 %v2538, %v2466
        %v2540 = vadd.f32 %v2539, %v2468
        %v2541 = vadd.f32 %v2540, %v2470
        %v2542 = vadd.f32 %v2541, %v2472
        %v2543 = vadd.f32 %v2542, %v2474
        %v2544 = vadd.f32 %v2543, %v2476
        %v2545 = vadd.f32 %v2544, %v2478
        %v2546 = vadd.f32 %v2545, %v2480
        %v2547 = vadd.f32 %v2546, %v2482
        %v2548 = vadd.f32 %v2547, %v2484
        %v2549 = vadd.f32 %v2548, %v2486
        %v2550 = vadd.f32 %v2549, %v2488
        %v2551 = vadd.f32 %v2550, %v2490
        %v2552 = vadd.f32 %v2551, %v2492
        %v2553 = vadd.f32 %v2552, %v2494
        %v2554 = vadd.f32 %v2553, %v2496
        %v2555 = vadd.f32 %v2554, %v2498
        %v2556 = vadd.f32 %v2555, %v2500
        %v2557 = vadd.f32 %v2556, %v2502
        %v2558 = vadd.f32 %v2557, %v2504
        %v2559 = vrot.slane %v2558, 4
        %v2560 = vadd.f32 %v2558, %v2559
        %v2561 = vrot.slane %v2560, 2
        %v2562 = vadd.f32 %v2560, %v2561
        %v2563 = vrot.slane %v2562, 1
        %v2564 = vadd.f32 %v2562, %v2563
        %v2565 = vld [vmem:[#allocation2] sm:$0x1]
        %2567 = vset.pattern.permute.xlu0 0
        %2568 = vperm.xlu0 %2567, %v2565
        %v2569 = vpop.permute.xlu0 %2568
        %v2571 = vperm.slane %v2569, 0
        %v2572 = vadd.f32 %v2534, %v2571
        %v2573 = vadd.f32 %v2564, %v2571
        %v2574 = vsub.f32 0.0, %v2572
        %v2575 = vsub.f32 0.0, %v2573
        %v2576 = vmul.f32 %v2574, 1.442695
        %v2577 = vpow.pop %v2576
        %v2578 = vmul.f32 %v2575, 1.442695
        %v2579 = vpow.pop %v2578
        %v2580 = vadd.f32 %v2577, 1.0
        %v2581 = vadd.f32 %v2579, 1.0
        %v2582 = vrcp.pop %v2580
        %v2583 = vrcp.pop %v2581
        %v2586 = vrot.slane %v2583, 7
        %vm2587 = vcmask 1040384
        %v2588 = vsel %vm2587, %v2582, %v2586
        %v2590 = vlaneseq
        %vm2591 = vcmp.ge.s32.totalorder %v2590, 0
        %vm2592 = vcmp.lt.s32.totalorder %v2590, 256
        %vm2593 = vmand %vm2591, %vm2592
        %2594 = vst.msk [vmem:[%s286] sm:$0x3] %vm2593, %v2588
        %s2595 = sand.u32 %s183, 1
        %s2596 = scalar_lea.sflag [#allocation4], %s2595
        %s2597 = sand.u32 %s183, 1
        %s2598 = smul.addr %s2597, 2
        %s2599 = scalar_lea.vmem [#allocation3], %s2598
        // Predicated region
        $region49: #{tpu_custom_call.1} parent=47 // pred_check
          %p2600 = pneg %p193
        $region50: #{tpu_custom_call.1} parent=47 // pred_check_branch
          %2602 = sbr.rel (%p2600) target = $region52
        $region51: #{tpu_custom_call.1} parent=47 // pred_region
          %s2603 = smul.u32 2, %s23
          %s2604 = ssub.s32 3, %s2603
          %p2605 = scmp.lt.s32.totalorder %s2604, 2
          %s2606 = scalar_select %p2605, %s2604, 2
          %s2607 = ssub.s32 2, %s2606
          %s2608 = sshll.u32 %s2607, 4
          %2609 = vsyncadd %s2596, %s2608
          %p2610 = scmp.ne.s32.totalorder 0, %s2606
          %s2611 = scalar_lea.hbm %s7, %s2603
          %s2612 = sshll.u32 %s2606, 4
          %s2613 = sshll.u32 %s2599, 4
          %s2614 = int_to_ptr.vmem [resolvable:$true] %s2613
          %s2615 = sshll.u32 %s2611, 4
          %s2616 = int_to_ptr.hbm [resolvable:$true] %s2615
          %2618 = dma.vmem_to_hbm [thread:$0]  (%p2610), %s2614, %s2612, %s2616, %s2596
        $region52: #{tpu_custom_call.1} parent=47 // pred_fallthru
          _
      $region48: #{tpu_custom_call.1} parent=5 // pred_fallthru
        _
      %p2619 = scmp.le.s32.totalorder 2, %s18
      // Predicated region
      $region53: #{tpu_custom_call.1} parent=5 // pred_check
        %p2620 = pneg %p2619
      $region54: #{tpu_custom_call.1} parent=5 // pred_check_branch
        %2622 = sbr.rel (%p2620) target = $region56
      $region55: #{tpu_custom_call.1} parent=5 // pred_region
        %s2623 = ssub.s32 %s18, 2
        // Predicated region
        $region57: #{tpu_custom_call.1} parent=55 // pred_check
          %p2624 = pneg %p199
        $region58: #{tpu_custom_call.1} parent=55 // pred_check_branch
          %2626 = sbr.rel (%p2624) target = $region60
        $region59: #{tpu_custom_call.1} parent=55 // pred_region
          %s2627 = sand.u32 %s184, 1
          %s2628 = scalar_lea.sflag [#allocation4], %s2627
          %s2629 = sand.u32 %s184, 1
          %s2630 = smul.addr %s2629, 2
          %s2631 = scalar_lea.vmem [#allocation3], %s2630
          %2633 = dma.done %s2628, 32
        $region60: #{tpu_custom_call.1} parent=55 // pred_fallthru
          _
      $region56: #{tpu_custom_call.1} parent=5 // pred_fallthru
        _
    $region6: #{tpu_custom_call.1} parent=1 // loop_footer
      %s22 = sadd.s32 1, %s18
    $region7: #{tpu_custom_call.1} parent=1 // loop_footer_branch
      %17 = sbr.rel target = $region3
    $region8: #{tpu_custom_call.1} parent=1 // loop_exit
      _
    %2634 = vsyncpa [#allocation4], 1
    %s2635 = scalar_lea.sflag [#allocation4], 1
    %2636 = vsyncpa %s2635, 1

</llo_original>
